<compile_context>
chip_gen: v6e
topology: v6e:2x2x1
jax: 0.10.0
libtpu: 0.0.40
codegen_flags: <defaults>
</compile_context>

<pallas_src>
import numpy as np
import jax
import jax.numpy as jnp
from jax.experimental import pallas as pl
from jax.experimental.pallas import tpu as pltpu


H = W = 128                    # spatial size pinned by the hard-coded 32-px-per-side unpad
HO = WO = 64                   # output spatial size


def _shift_left(v, k):
    """Shift the last (lane) axis by k toward lower indices.

    result[..., i] = v[..., i + k] for i < n - k; the wrapped top lanes only ever land
    on lanes whose contents are ignored downstream.  Pure slice+concat so it lowers in
    both interpret mode and Mosaic (pltpu.roll would also work on hardware).
    """
    return jnp.concatenate([v[..., k:], v[..., :k]], axis=-1)


# ---------------------------------------------------------------------------
# Kernel: one block of nb batch elements per grid step, full forward pass.
#   x_ref   : (nb, 2, 32, 512)  -- input rows grouped 4-per-lane-row (row = 4A + lane//128)
#   par_ref : (36,) f32 in SMEM -- all weights/biases, flat
#   g_ref   : (256, 64) bf16    -- fused lane-compaction + conv-transpose scatter matrix
#   outa_ref: (nb, 16, 256)     -- branch A, reshapes (free) to (nb, 64, 64)
#   outb_ref: (nb, 32, 128)     -- branch B, reshapes (free) to (nb, 64, 64)
# ---------------------------------------------------------------------------
def toy_kernel(x_ref, par_ref, g_ref, outa_ref, outb_ref):
    nb = x_ref.shape[0]
    p = par_ref

    w1 = ((p[0], p[1]), (p[2], p[3])); b1 = (p[4], p[5])          # Conv 2->2
    w2 = ((p[6], p[7]), (p[8], p[9])); b2 = (p[10], p[11])        # Conv 2->2

    def wt(ci, co, di, dj):                                       # ConvT (ci, co, kh, kw)
        return p[12 + ((ci * 2 + co) * 2 + di) * 2 + dj]

    bt = (p[28], p[29])
    w3 = (p[30], p[31]); b3 = p[32]                               # final Conv 2->1
    wb = (p[33], p[34]); bb = p[35]                               # branch-A Conv 2->1

    # ---------------- branch A: center crop + 1x1 conv (2 -> 1) -----------------
    # Input rows 32..95 are row-groups 8..23; output row 4A'+t <- input row 32+4A'+t.
    a0 = x_ref[:, 0:1, 8:24, :][:, 0]                             # (nb, 16, 512)
    a1 = x_ref[:, 1:2, 8:24, :][:, 0]
    xa = wb[0] * a0 + wb[1] * a1 + bb
    # crop columns 32..95 inside each of the 4 per-lane-row slices
    outa_ref[...] = jnp.concatenate(
        [xa[..., 128 * t + 32: 128 * t + 96] for t in range(4)], axis=-1)

    # ---------------- branch B: (conv -> maxpool2 -> relu) x 2 ------------------
    CS = 8                                                        # row-groups per chunk
    q_parts = ([], [])
    for g0 in range(0, 32, CS):
        v0 = x_ref[:, 0:1, g0:g0 + CS, :][:, 0]                   # (nb, CS, 512)
        v1 = x_ref[:, 1:2, g0:g0 + CS, :][:, 0]
        y = []
        for co in range(2):                                       # conv1 + pool1 + relu
            t = w1[co][0] * v0 + w1[co][1] * v1 + b1[co]
            m = jnp.concatenate(
                [jnp.maximum(t[..., 0:128], t[..., 128:256]),     # pool1 row 2A
                 jnp.maximum(t[..., 256:384], t[..., 384:512])],  # pool1 row 2A+1
                axis=-1)                                          # (nb, CS, 256)
            m = jnp.maximum(m, _shift_left(m, 1))                 # col-pair max (valid: even lanes)
            y.append(jnp.maximum(m, 0.0))
        for co in range(2):                                       # conv2 + pool2 + relu
            z = w2[co][0] * y[0] + w2[co][1] * y[1] + b2[co]
            z = jnp.maximum(z[..., 0:128], z[..., 128:256])       # pool2 row max
            z = jnp.maximum(z, _shift_left(z, 2))                 # col max (valid: lanes % 4 == 0)
            q_parts[co].append(jnp.maximum(z, 0.0))               # (nb, CS, 128)
    q0 = jnp.concatenate(q_parts[0], axis=1)                      # (nb, 32, 128)
    q1 = jnp.concatenate(q_parts[1], axis=1)

    # ---- ConvTranspose(k=2, s=2) + ReLU + final 1x1 conv, still lane-deferred ----
    def plane(di, dj):
        t0 = jnp.maximum(wt(0, 0, di, dj) * q0 + wt(1, 0, di, dj) * q1 + bt[0], 0.0)
        t1 = jnp.maximum(wt(0, 1, di, dj) * q0 + wt(1, 1, di, dj) * q1 + bt[1], 0.0)
        return w3[0] * t0 + w3[1] * t1                            # valid at lanes % 4 == 0

    lhs = jnp.concatenate(
        [jnp.concatenate([plane(0, 0), plane(0, 1)], axis=-1),    # di = 0 rows
         jnp.concatenate([plane(1, 0), plane(1, 1)], axis=-1)],   # di = 1 rows
        axis=1)                                                   # (nb, 64, 256)
    lhs = lhs.reshape(nb * 64, 256)

    # Single fused compaction + scatter matmul.  Exact-ish via manual f32 -> bf16
    # hi/lo split (deterministic, independent of default matmul precision).
    hi = lhs.astype(jnp.bfloat16)
    lo = (lhs - hi.astype(jnp.float32)).astype(jnp.bfloat16)
    g = g_ref[...]
    r = (jnp.dot(hi, g, preferred_element_type=jnp.float32)
         + jnp.dot(lo, g, preferred_element_type=jnp.float32) + b3)   # (nb*64, 64)
    r = r.reshape(nb, 2, 32, 64)                                  # [n, di, A, col]
    # lanes = [di=0 row | di=1 row]; (32, 128) reshapes (free) to (64, 64) rows 2A+di
    outb_ref[...] = jnp.concatenate([r[:, 0], r[:, 1]], axis=-1)


# ---------------------------------------------------------------------------
# Wrapper
# ---------------------------------------------------------------------------
def _pick_block(n, max_nb=8):
    divs = [d for d in range(1, n + 1) if n % d == 0 and d <= max_nb]
    for min_steps in (4, 2, 1):
        cand = [d for d in divs if n // d >= min_steps]
        if cand:
            return max(cand)
    return 1


def _scatter_matrix():
    # Composed 0/1 matrix: LHS lane 4j of the dj=0 half -> output col 2j,
    #                      LHS lane 4j of the dj=1 half -> output col 2j+1.
    g = np.zeros((256, 64), np.float32)
    j = np.arange(32)
    g[4 * j, 2 * j] = 1.0
    g[128 + 4 * j, 2 * j + 1] = 1.0
    return jnp.asarray(g, jnp.bfloat16)


def toy_model_forward(x, params, max_block_n=8):
    w1, b1, w2, b2, wt, bt, w3, b3, wb, bb = params
    N, C, Hx, Wx = x.shape
    assert (C, Hx, Wx) == (2, H, W), "spatial size pinned to 128 by the 32-px unpad"

    nb = _pick_block(N, max_block_n)
    grid = (N // nb,)

    flat = jnp.concatenate([jnp.asarray(a, jnp.float32).reshape(-1)
                            for a in (w1, b1, w2, b2, wt, bt, w3, b3, wb, bb)])
    g = _scatter_matrix()

    # Free row-major reshape: row 4A + t of each image becomes lane block t of group A.
    xr = x.astype(jnp.float32).reshape(N, 2, 32, 512)

    outa, outb = pl.pallas_call(
        toy_kernel,
        out_shape=(jax.ShapeDtypeStruct((N, 16, 256), jnp.float32),
                   jax.ShapeDtypeStruct((N, 32, 128), jnp.float32)),
        grid=grid,
        in_specs=[
            pl.BlockSpec((nb, 2, 32, 512), lambda i: (i, 0, 0, 0)),
            pl.BlockSpec(memory_space=pltpu.MemorySpace.SMEM),          # flat params
            pl.BlockSpec((256, 64), lambda i: (0, 0)),                  # resident constant
        ],
        out_specs=(
            pl.BlockSpec((nb, 16, 256), lambda i: (i, 0, 0)),
            pl.BlockSpec((nb, 32, 128), lambda i: (i, 0, 0)),
        ),
        compiler_params=pltpu.CompilerParams(dimension_semantics=("parallel",)),
    )(xr, flat, g)

    # Both reshapes are free (row-major); only the small channel concat copies.
    x2 = outa.reshape(N, 1, HO, WO)
    x3 = outb.reshape(N, 1, HO, WO)
    return jnp.concatenate([x2, x3], axis=1)


# ---------------------------------------------------------------------------
# Pure-JAX reference (correctness check only).
# ---------------------------------------------------------------------------
def ref_forward(x, params):
    w1, b1, w2, b2, wt, bt, w3, b3, wb, bb = params

    def conv1x1(x, w, b):
        outs = [sum(w[o, c] * x[:, c] for c in range(x.shape[1])) + b[o]
                for o in range(w.shape[0])]
        return jnp.stack(outs, axis=1)

    def pool(x):
        n, c, h, w_ = x.shape
        return jnp.max(x.reshape(n, c, h // 2, 2, w_ // 2, 2), axis=(3, 5))

    relu = lambda t: jnp.maximum(t, 0.0)

    def convT(x, w, b):
        n, ci, h, w_ = x.shape
        co = w.shape[1]
        out = jnp.zeros((n, co, 2 * h, 2 * w_), x.dtype)
        for di in range(2):
            for dj in range(2):
                plane = jnp.stack(
                    [sum(w[c, o, di, dj] * x[:, c] for c in range(ci))
                     for o in range(co)], axis=1)
                out = out.at[:, :, di::2, dj::2].set(plane)
        return out + b[None, :, None, None]

    x1 = x[:, :, 32:-32, 32:-32]
    x2 = conv1x1(x1, wb, bb)
    y = relu(pool(conv1x1(x, w1, b1)))
    y = relu(pool(conv1x1(y, w2, b2)))
    y = relu(convT(y, wt, bt))
    x3 = conv1x1(y, w3, b3)
    return jnp.concatenate([x2, x3], axis=1)


def init_params(key):
    ks = jax.random.split(key, 10)
    mk = lambda k, s, scale=0.5: (scale * jax.random.normal(k, s)).astype(jnp.float32)
    w1 = mk(ks[0], (2, 2))          # Conv(2->2, 1x1)
    b1 = mk(ks[1], (2,))
    w2 = mk(ks[2], (2, 2))          # Conv(2->2, 1x1)
    b2 = mk(ks[3], (2,))
    wt = mk(ks[4], (2, 2, 2, 2))    # ConvTranspose(2->2, k=2, s=2): (in, out, kh, kw)
    bt = mk(ks[5], (2,))
    w3 = mk(ks[6], (1, 2))          # Conv(2->1, 1x1)
    b3 = mk(ks[7], (1,))
    wb = mk(ks[8], (1, 2))          # fresh Conv(2->1, 1x1) created in forward()
    bb = mk(ks[9], (1,))
    return (w1, b1, w2, b2, wt, bt, w3, b3, wb, bb)


if __name__ == "__main__":
    key = jax.random.PRNGKey(0)
    k_x, k_p = jax.random.split(key)
    # Spatial size is pinned to 128 by the hard-coded 32-per-side unpad.
    # Batch 8 -> block of 2 per grid step, 4 grid steps.
    N = 8
    x = jax.random.normal(k_x, (N, 2, H, W), dtype=jnp.float32)
    params = init_params(k_p)

    out = jax.block_until_ready(toy_model_forward(x, params))
    ref = jax.block_until_ready(ref_forward(x, params))

    assert out.shape == (N, 2, HO, WO), out.shape
    err = float(jnp.max(jnp.abs(out - ref)))
    assert jnp.allclose(out, ref, atol=1e-4, rtol=1e-4), err

    print("KERNEL_OK")
</pallas_src>

<mosaic_0001>
module attributes {stable_mosaic.version = 11 : i64} {
  func.func @toy_kernel(%arg0: i32, %arg1: memref<2x2x32x512xf32, #tpu.memory_space<vmem>>, %arg2: memref<36xf32, #tpu.memory_space<smem>>, %arg3: memref<256x64xbf16, #tpu.memory_space<vmem>>, %arg4: memref<2x16x256xf32, #tpu.memory_space<vmem>>, %arg5: memref<2x32x128xf32, #tpu.memory_space<vmem>>) attributes {dimension_semantics = [#tpu.dimension_semantics<parallel>], iteration_bounds = array<i64: 4>, scalar_prefetch = 0 : i64, scratch_operands = 0 : i64, tpu.core_type = #tpu.core_type<tc>, window_params = [{transform_indices = @transform_0, window_bounds = array<i64: 2, 2, 32, 512>}, {transform_indices = @transform_1, window_bounds = array<i64: 36>}, {pipeline_mode = #tpu.pipeline_mode<synchronous>, transform_indices = @transform_2, window_bounds = array<i64: 256, 64>}, {transform_indices = @transform_3, window_bounds = array<i64: 2, 16, 256>}, {transform_indices = @transform_4, window_bounds = array<i64: 2, 32, 128>}]} {
    %c0 = arith.constant 0 : index
    %0 = memref.load %arg2[%c0] : memref<36xf32, #tpu.memory_space<smem>>
    %c1 = arith.constant 1 : index
    %1 = memref.load %arg2[%c1] : memref<36xf32, #tpu.memory_space<smem>>
    %c2 = arith.constant 2 : index
    %2 = memref.load %arg2[%c2] : memref<36xf32, #tpu.memory_space<smem>>
    %c3 = arith.constant 3 : index
    %3 = memref.load %arg2[%c3] : memref<36xf32, #tpu.memory_space<smem>>
    %c4 = arith.constant 4 : index
    %4 = memref.load %arg2[%c4] : memref<36xf32, #tpu.memory_space<smem>>
    %c5 = arith.constant 5 : index
    %5 = memref.load %arg2[%c5] : memref<36xf32, #tpu.memory_space<smem>>
    %c6 = arith.constant 6 : index
    %6 = memref.load %arg2[%c6] : memref<36xf32, #tpu.memory_space<smem>>
    %c7 = arith.constant 7 : index
    %7 = memref.load %arg2[%c7] : memref<36xf32, #tpu.memory_space<smem>>
    %c8 = arith.constant 8 : index
    %8 = memref.load %arg2[%c8] : memref<36xf32, #tpu.memory_space<smem>>
    %c9 = arith.constant 9 : index
    %9 = memref.load %arg2[%c9] : memref<36xf32, #tpu.memory_space<smem>>
    %c10 = arith.constant 10 : index
    %10 = memref.load %arg2[%c10] : memref<36xf32, #tpu.memory_space<smem>>
    %c11 = arith.constant 11 : index
    %11 = memref.load %arg2[%c11] : memref<36xf32, #tpu.memory_space<smem>>
    %c28 = arith.constant 28 : index
    %12 = memref.load %arg2[%c28] : memref<36xf32, #tpu.memory_space<smem>>
    %c29 = arith.constant 29 : index
    %13 = memref.load %arg2[%c29] : memref<36xf32, #tpu.memory_space<smem>>
    %c30 = arith.constant 30 : index
    %14 = memref.load %arg2[%c30] : memref<36xf32, #tpu.memory_space<smem>>
    %c31 = arith.constant 31 : index
    %15 = memref.load %arg2[%c31] : memref<36xf32, #tpu.memory_space<smem>>
    %c32 = arith.constant 32 : index
    %16 = memref.load %arg2[%c32] : memref<36xf32, #tpu.memory_space<smem>>
    %c33 = arith.constant 33 : index
    %17 = memref.load %arg2[%c33] : memref<36xf32, #tpu.memory_space<smem>>
    %c34 = arith.constant 34 : index
    %18 = memref.load %arg2[%c34] : memref<36xf32, #tpu.memory_space<smem>>
    %c35 = arith.constant 35 : index
    %19 = memref.load %arg2[%c35] : memref<36xf32, #tpu.memory_space<smem>>
    %c0_0 = arith.constant 0 : index
    %c0_1 = arith.constant 0 : index
    %c8_2 = arith.constant 8 : index
    %c0_3 = arith.constant 0 : index
    %20 = vector.load %arg1[%c0_0, %c0_1, %c8_2, %c0_3] : memref<2x2x32x512xf32, #tpu.memory_space<vmem>>, vector<2x1x16x512xf32>
    %21 = vector.shape_cast %20 : vector<2x1x16x512xf32> to vector<2x16x512xf32>
    %c0_4 = arith.constant 0 : index
    %c1_5 = arith.constant 1 : index
    %c8_6 = arith.constant 8 : index
    %c0_7 = arith.constant 0 : index
    %22 = vector.load %arg1[%c0_4, %c1_5, %c8_6, %c0_7] : memref<2x2x32x512xf32, #tpu.memory_space<vmem>>, vector<2x1x16x512xf32>
    %23 = vector.shape_cast %22 : vector<2x1x16x512xf32> to vector<2x16x512xf32>
    %24 = vector.broadcast %17 : f32 to vector<2x16x512xf32>
    %25 = arith.mulf %24, %21 : vector<2x16x512xf32>
    %26 = vector.broadcast %18 : f32 to vector<2x16x512xf32>
    %27 = arith.mulf %26, %23 : vector<2x16x512xf32>
    %28 = arith.addf %25, %27 : vector<2x16x512xf32>
    %29 = vector.broadcast %19 : f32 to vector<2x16x512xf32>
    %30 = arith.addf %28, %29 : vector<2x16x512xf32>
    %31 = vector.extract_strided_slice %30 {offsets = [0, 0, 32], sizes = [2, 16, 64], strides = [1, 1, 1]} : vector<2x16x512xf32> to vector<2x16x64xf32>
    %32 = vector.extract_strided_slice %30 {offsets = [0, 0, 160], sizes = [2, 16, 64], strides = [1, 1, 1]} : vector<2x16x512xf32> to vector<2x16x64xf32>
    %33 = vector.extract_strided_slice %30 {offsets = [0, 0, 288], sizes = [2, 16, 64], strides = [1, 1, 1]} : vector<2x16x512xf32> to vector<2x16x64xf32>
    %34 = vector.extract_strided_slice %30 {offsets = [0, 0, 416], sizes = [2, 16, 64], strides = [1, 1, 1]} : vector<2x16x512xf32> to vector<2x16x64xf32>
    %35 = tpu.concatenate %31, %32, %33, %34 in 2 : vector<2x16x64xf32>, vector<2x16x64xf32>, vector<2x16x64xf32>, vector<2x16x64xf32> -> vector<2x16x256xf32>
    %c0_8 = arith.constant 0 : index
    %c0_9 = arith.constant 0 : index
    %c0_10 = arith.constant 0 : index
    %36 = vector.load %arg4[%c0_8, %c0_9, %c0_10] : memref<2x16x256xf32, #tpu.memory_space<vmem>>, vector<2x16x256xf32>
    tpu.vector_store %arg4[%c0_8, %c0_9, %c0_10], %35 {strides = array<i32>} : memref<2x16x256xf32, #tpu.memory_space<vmem>>, vector<2x16x256xf32>,
    %c0_11 = arith.constant 0 : index
    %c0_12 = arith.constant 0 : index
    %c0_13 = arith.constant 0 : index
    %c0_14 = arith.constant 0 : index
    %37 = vector.load %arg1[%c0_11, %c0_12, %c0_13, %c0_14] : memref<2x2x32x512xf32, #tpu.memory_space<vmem>>, vector<2x1x8x512xf32>
    %38 = vector.shape_cast %37 : vector<2x1x8x512xf32> to vector<2x8x512xf32>
    %c0_15 = arith.constant 0 : index
    %c1_16 = arith.constant 1 : index
    %c0_17 = arith.constant 0 : index
    %c0_18 = arith.constant 0 : index
    %39 = vector.load %arg1[%c0_15, %c1_16, %c0_17, %c0_18] : memref<2x2x32x512xf32, #tpu.memory_space<vmem>>, vector<2x1x8x512xf32>
    %40 = vector.shape_cast %39 : vector<2x1x8x512xf32> to vector<2x8x512xf32>
    %41 = vector.broadcast %0 : f32 to vector<2x8x512xf32>
    %42 = arith.mulf %41, %38 : vector<2x8x512xf32>
    %43 = vector.broadcast %1 : f32 to vector<2x8x512xf32>
    %44 = arith.mulf %43, %40 : vector<2x8x512xf32>
    %45 = arith.addf %42, %44 : vector<2x8x512xf32>
    %46 = vector.broadcast %4 : f32 to vector<2x8x512xf32>
    %47 = arith.addf %45, %46 : vector<2x8x512xf32>
    %48 = vector.extract_strided_slice %47 {offsets = [0, 0, 0], sizes = [2, 8, 128], strides = [1, 1, 1]} : vector<2x8x512xf32> to vector<2x8x128xf32>
    %49 = vector.extract_strided_slice %47 {offsets = [0, 0, 128], sizes = [2, 8, 128], strides = [1, 1, 1]} : vector<2x8x512xf32> to vector<2x8x128xf32>
    %50 = arith.maximumf %48, %49 : vector<2x8x128xf32>
    %51 = vector.extract_strided_slice %47 {offsets = [0, 0, 256], sizes = [2, 8, 128], strides = [1, 1, 1]} : vector<2x8x512xf32> to vector<2x8x128xf32>
    %52 = vector.extract_strided_slice %47 {offsets = [0, 0, 384], sizes = [2, 8, 128], strides = [1, 1, 1]} : vector<2x8x512xf32> to vector<2x8x128xf32>
    %53 = arith.maximumf %51, %52 : vector<2x8x128xf32>
    %54 = tpu.concatenate %50, %53 in 2 : vector<2x8x128xf32>, vector<2x8x128xf32> -> vector<2x8x256xf32>
    %55 = vector.extract_strided_slice %54 {offsets = [0, 0, 1], sizes = [2, 8, 255], strides = [1, 1, 1]} : vector<2x8x256xf32> to vector<2x8x255xf32>
    %56 = vector.extract_strided_slice %54 {offsets = [0, 0, 0], sizes = [2, 8, 1], strides = [1, 1, 1]} : vector<2x8x256xf32> to vector<2x8x1xf32>
    %57 = tpu.concatenate %55, %56 in 2 : vector<2x8x255xf32>, vector<2x8x1xf32> -> vector<2x8x256xf32>
    %58 = arith.maximumf %54, %57 : vector<2x8x256xf32>
    %cst = arith.constant 0.000000e+00 : f32
    %59 = vector.broadcast %cst : f32 to vector<2x8x256xf32>
    %60 = arith.maximumf %58, %59 : vector<2x8x256xf32>
    %61 = vector.broadcast %2 : f32 to vector<2x8x512xf32>
    %62 = arith.mulf %61, %38 : vector<2x8x512xf32>
    %63 = vector.broadcast %3 : f32 to vector<2x8x512xf32>
    %64 = arith.mulf %63, %40 : vector<2x8x512xf32>
    %65 = arith.addf %62, %64 : vector<2x8x512xf32>
    %66 = vector.broadcast %5 : f32 to vector<2x8x512xf32>
    %67 = arith.addf %65, %66 : vector<2x8x512xf32>
    %68 = vector.extract_strided_slice %67 {offsets = [0, 0, 0], sizes = [2, 8, 128], strides = [1, 1, 1]} : vector<2x8x512xf32> to vector<2x8x128xf32>
    %69 = vector.extract_strided_slice %67 {offsets = [0, 0, 128], sizes = [2, 8, 128], strides = [1, 1, 1]} : vector<2x8x512xf32> to vector<2x8x128xf32>
    %70 = arith.maximumf %68, %69 : vector<2x8x128xf32>
    %71 = vector.extract_strided_slice %67 {offsets = [0, 0, 256], sizes = [2, 8, 128], strides = [1, 1, 1]} : vector<2x8x512xf32> to vector<2x8x128xf32>
    %72 = vector.extract_strided_slice %67 {offsets = [0, 0, 384], sizes = [2, 8, 128], strides = [1, 1, 1]} : vector<2x8x512xf32> to vector<2x8x128xf32>
    %73 = arith.maximumf %71, %72 : vector<2x8x128xf32>
    %74 = tpu.concatenate %70, %73 in 2 : vector<2x8x128xf32>, vector<2x8x128xf32> -> vector<2x8x256xf32>
    %75 = vector.extract_strided_slice %74 {offsets = [0, 0, 1], sizes = [2, 8, 255], strides = [1, 1, 1]} : vector<2x8x256xf32> to vector<2x8x255xf32>
    %76 = vector.extract_strided_slice %74 {offsets = [0, 0, 0], sizes = [2, 8, 1], strides = [1, 1, 1]} : vector<2x8x256xf32> to vector<2x8x1xf32>
    %77 = tpu.concatenate %75, %76 in 2 : vector<2x8x255xf32>, vector<2x8x1xf32> -> vector<2x8x256xf32>
    %78 = arith.maximumf %74, %77 : vector<2x8x256xf32>
    %cst_19 = arith.constant 0.000000e+00 : f32
    %79 = vector.broadcast %cst_19 : f32 to vector<2x8x256xf32>
    %80 = arith.maximumf %78, %79 : vector<2x8x256xf32>
    %81 = vector.broadcast %6 : f32 to vector<2x8x256xf32>
    %82 = arith.mulf %81, %60 : vector<2x8x256xf32>
    %83 = vector.broadcast %7 : f32 to vector<2x8x256xf32>
    %84 = arith.mulf %83, %80 : vector<2x8x256xf32>
    %85 = arith.addf %82, %84 : vector<2x8x256xf32>
    %86 = vector.broadcast %10 : f32 to vector<2x8x256xf32>
    %87 = arith.addf %85, %86 : vector<2x8x256xf32>
    %88 = vector.extract_strided_slice %87 {offsets = [0, 0, 0], sizes = [2, 8, 128], strides = [1, 1, 1]} : vector<2x8x256xf32> to vector<2x8x128xf32>
    %89 = vector.extract_strided_slice %87 {offsets = [0, 0, 128], sizes = [2, 8, 128], strides = [1, 1, 1]} : vector<2x8x256xf32> to vector<2x8x128xf32>
    %90 = arith.maximumf %88, %89 : vector<2x8x128xf32>
    %91 = vector.extract_strided_slice %90 {offsets = [0, 0, 2], sizes = [2, 8, 126], strides = [1, 1, 1]} : vector<2x8x128xf32> to vector<2x8x126xf32>
    %92 = vector.extract_strided_slice %90 {offsets = [0, 0, 0], sizes = [2, 8, 2], strides = [1, 1, 1]} : vector<2x8x128xf32> to vector<2x8x2xf32>
    %93 = tpu.concatenate %91, %92 in 2 : vector<2x8x126xf32>, vector<2x8x2xf32> -> vector<2x8x128xf32>
    %94 = arith.maximumf %90, %93 : vector<2x8x128xf32>
    %cst_20 = arith.constant 0.000000e+00 : f32
    %95 = vector.broadcast %cst_20 : f32 to vector<2x8x128xf32>
    %96 = arith.maximumf %94, %95 : vector<2x8x128xf32>
    %97 = vector.broadcast %8 : f32 to vector<2x8x256xf32>
    %98 = arith.mulf %97, %60 : vector<2x8x256xf32>
    %99 = vector.broadcast %9 : f32 to vector<2x8x256xf32>
    %100 = arith.mulf %99, %80 : vector<2x8x256xf32>
    %101 = arith.addf %98, %100 : vector<2x8x256xf32>
    %102 = vector.broadcast %11 : f32 to vector<2x8x256xf32>
    %103 = arith.addf %101, %102 : vector<2x8x256xf32>
    %104 = vector.extract_strided_slice %103 {offsets = [0, 0, 0], sizes = [2, 8, 128], strides = [1, 1, 1]} : vector<2x8x256xf32> to vector<2x8x128xf32>
    %105 = vector.extract_strided_slice %103 {offsets = [0, 0, 128], sizes = [2, 8, 128], strides = [1, 1, 1]} : vector<2x8x256xf32> to vector<2x8x128xf32>
    %106 = arith.maximumf %104, %105 : vector<2x8x128xf32>
    %107 = vector.extract_strided_slice %106 {offsets = [0, 0, 2], sizes = [2, 8, 126], strides = [1, 1, 1]} : vector<2x8x128xf32> to vector<2x8x126xf32>
    %108 = vector.extract_strided_slice %106 {offsets = [0, 0, 0], sizes = [2, 8, 2], strides = [1, 1, 1]} : vector<2x8x128xf32> to vector<2x8x2xf32>
    %109 = tpu.concatenate %107, %108 in 2 : vector<2x8x126xf32>, vector<2x8x2xf32> -> vector<2x8x128xf32>
    %110 = arith.maximumf %106, %109 : vector<2x8x128xf32>
    %cst_21 = arith.constant 0.000000e+00 : f32
    %111 = vector.broadcast %cst_21 : f32 to vector<2x8x128xf32>
    %112 = arith.maximumf %110, %111 : vector<2x8x128xf32>
    %c0_22 = arith.constant 0 : index
    %c0_23 = arith.constant 0 : index
    %c8_24 = arith.constant 8 : index
    %c0_25 = arith.constant 0 : index
    %113 = vector.load %arg1[%c0_22, %c0_23, %c8_24, %c0_25] : memref<2x2x32x512xf32, #tpu.memory_space<vmem>>, vector<2x1x8x512xf32>
    %114 = vector.shape_cast %113 : vector<2x1x8x512xf32> to vector<2x8x512xf32>
    %c0_26 = arith.constant 0 : index
    %c1_27 = arith.constant 1 : index
    %c8_28 = arith.constant 8 : index
    %c0_29 = arith.constant 0 : index
    %115 = vector.load %arg1[%c0_26, %c1_27, %c8_28, %c0_29] : memref<2x2x32x512xf32, #tpu.memory_space<vmem>>, vector<2x1x8x512xf32>
    %116 = vector.shape_cast %115 : vector<2x1x8x512xf32> to vector<2x8x512xf32>
    %117 = vector.broadcast %0 : f32 to vector<2x8x512xf32>
    %118 = arith.mulf %117, %114 : vector<2x8x512xf32>
    %119 = vector.broadcast %1 : f32 to vector<2x8x512xf32>
    %120 = arith.mulf %119, %116 : vector<2x8x512xf32>
    %121 = arith.addf %118, %120 : vector<2x8x512xf32>
    %122 = vector.broadcast %4 : f32 to vector<2x8x512xf32>
    %123 = arith.addf %121, %122 : vector<2x8x512xf32>
    %124 = vector.extract_strided_slice %123 {offsets = [0, 0, 0], sizes = [2, 8, 128], strides = [1, 1, 1]} : vector<2x8x512xf32> to vector<2x8x128xf32>
    %125 = vector.extract_strided_slice %123 {offsets = [0, 0, 128], sizes = [2, 8, 128], strides = [1, 1, 1]} : vector<2x8x512xf32> to vector<2x8x128xf32>
    %126 = arith.maximumf %124, %125 : vector<2x8x128xf32>
    %127 = vector.extract_strided_slice %123 {offsets = [0, 0, 256], sizes = [2, 8, 128], strides = [1, 1, 1]} : vector<2x8x512xf32> to vector<2x8x128xf32>
    %128 = vector.extract_strided_slice %123 {offsets = [0, 0, 384], sizes = [2, 8, 128], strides = [1, 1, 1]} : vector<2x8x512xf32> to vector<2x8x128xf32>
    %129 = arith.maximumf %127, %128 : vector<2x8x128xf32>
    %130 = tpu.concatenate %126, %129 in 2 : vector<2x8x128xf32>, vector<2x8x128xf32> -> vector<2x8x256xf32>
    %131 = vector.extract_strided_slice %130 {offsets = [0, 0, 1], sizes = [2, 8, 255], strides = [1, 1, 1]} : vector<2x8x256xf32> to vector<2x8x255xf32>
    %132 = vector.extract_strided_slice %130 {offsets = [0, 0, 0], sizes = [2, 8, 1], strides = [1, 1, 1]} : vector<2x8x256xf32> to vector<2x8x1xf32>
    %133 = tpu.concatenate %131, %132 in 2 : vector<2x8x255xf32>, vector<2x8x1xf32> -> vector<2x8x256xf32>
    %134 = arith.maximumf %130, %133 : vector<2x8x256xf32>
    %cst_30 = arith.constant 0.000000e+00 : f32
    %135 = vector.broadcast %cst_30 : f32 to vector<2x8x256xf32>
    %136 = arith.maximumf %134, %135 : vector<2x8x256xf32>
    %137 = vector.broadcast %2 : f32 to vector<2x8x512xf32>
    %138 = arith.mulf %137, %114 : vector<2x8x512xf32>
    %139 = vector.broadcast %3 : f32 to vector<2x8x512xf32>
    %140 = arith.mulf %139, %116 : vector<2x8x512xf32>
    %141 = arith.addf %138, %140 : vector<2x8x512xf32>
    %142 = vector.broadcast %5 : f32 to vector<2x8x512xf32>
    %143 = arith.addf %141, %142 : vector<2x8x512xf32>
    %144 = vector.extract_strided_slice %143 {offsets = [0, 0, 0], sizes = [2, 8, 128], strides = [1, 1, 1]} : vector<2x8x512xf32> to vector<2x8x128xf32>
    %145 = vector.extract_strided_slice %143 {offsets = [0, 0, 128], sizes = [2, 8, 128], strides = [1, 1, 1]} : vector<2x8x512xf32> to vector<2x8x128xf32>
    %146 = arith.maximumf %144, %145 : vector<2x8x128xf32>
    %147 = vector.extract_strided_slice %143 {offsets = [0, 0, 256], sizes = [2, 8, 128], strides = [1, 1, 1]} : vector<2x8x512xf32> to vector<2x8x128xf32>
    %148 = vector.extract_strided_slice %143 {offsets = [0, 0, 384], sizes = [2, 8, 128], strides = [1, 1, 1]} : vector<2x8x512xf32> to vector<2x8x128xf32>
    %149 = arith.maximumf %147, %148 : vector<2x8x128xf32>
    %150 = tpu.concatenate %146, %149 in 2 : vector<2x8x128xf32>, vector<2x8x128xf32> -> vector<2x8x256xf32>
    %151 = vector.extract_strided_slice %150 {offsets = [0, 0, 1], sizes = [2, 8, 255], strides = [1, 1, 1]} : vector<2x8x256xf32> to vector<2x8x255xf32>
    %152 = vector.extract_strided_slice %150 {offsets = [0, 0, 0], sizes = [2, 8, 1], strides = [1, 1, 1]} : vector<2x8x256xf32> to vector<2x8x1xf32>
    %153 = tpu.concatenate %151, %152 in 2 : vector<2x8x255xf32>, vector<2x8x1xf32> -> vector<2x8x256xf32>
    %154 = arith.maximumf %150, %153 : vector<2x8x256xf32>
    %cst_31 = arith.constant 0.000000e+00 : f32
    %155 = vector.broadcast %cst_31 : f32 to vector<2x8x256xf32>
    %156 = arith.maximumf %154, %155 : vector<2x8x256xf32>
    %157 = vector.broadcast %6 : f32 to vector<2x8x256xf32>
    %158 = arith.mulf %157, %136 : vector<2x8x256xf32>
    %159 = vector.broadcast %7 : f32 to vector<2x8x256xf32>
    %160 = arith.mulf %159, %156 : vector<2x8x256xf32>
    %161 = arith.addf %158, %160 : vector<2x8x256xf32>
    %162 = vector.broadcast %10 : f32 to vector<2x8x256xf32>
    %163 = arith.addf %161, %162 : vector<2x8x256xf32>
    %164 = vector.extract_strided_slice %163 {offsets = [0, 0, 0], sizes = [2, 8, 128], strides = [1, 1, 1]} : vector<2x8x256xf32> to vector<2x8x128xf32>
    %165 = vector.extract_strided_slice %163 {offsets = [0, 0, 128], sizes = [2, 8, 128], strides = [1, 1, 1]} : vector<2x8x256xf32> to vector<2x8x128xf32>
    %166 = arith.maximumf %164, %165 : vector<2x8x128xf32>
    %167 = vector.extract_strided_slice %166 {offsets = [0, 0, 2], sizes = [2, 8, 126], strides = [1, 1, 1]} : vector<2x8x128xf32> to vector<2x8x126xf32>
    %168 = vector.extract_strided_slice %166 {offsets = [0, 0, 0], sizes = [2, 8, 2], strides = [1, 1, 1]} : vector<2x8x128xf32> to vector<2x8x2xf32>
    %169 = tpu.concatenate %167, %168 in 2 : vector<2x8x126xf32>, vector<2x8x2xf32> -> vector<2x8x128xf32>
    %170 = arith.maximumf %166, %169 : vector<2x8x128xf32>
    %cst_32 = arith.constant 0.000000e+00 : f32
    %171 = vector.broadcast %cst_32 : f32 to vector<2x8x128xf32>
    %172 = arith.maximumf %170, %171 : vector<2x8x128xf32>
    %173 = vector.broadcast %8 : f32 to vector<2x8x256xf32>
    %174 = arith.mulf %173, %136 : vector<2x8x256xf32>
    %175 = vector.broadcast %9 : f32 to vector<2x8x256xf32>
    %176 = arith.mulf %175, %156 : vector<2x8x256xf32>
    %177 = arith.addf %174, %176 : vector<2x8x256xf32>
    %178 = vector.broadcast %11 : f32 to vector<2x8x256xf32>
    %179 = arith.addf %177, %178 : vector<2x8x256xf32>
    %180 = vector.extract_strided_slice %179 {offsets = [0, 0, 0], sizes = [2, 8, 128], strides = [1, 1, 1]} : vector<2x8x256xf32> to vector<2x8x128xf32>
    %181 = vector.extract_strided_slice %179 {offsets = [0, 0, 128], sizes = [2, 8, 128], strides = [1, 1, 1]} : vector<2x8x256xf32> to vector<2x8x128xf32>
    %182 = arith.maximumf %180, %181 : vector<2x8x128xf32>
    %183 = vector.extract_strided_slice %182 {offsets = [0, 0, 2], sizes = [2, 8, 126], strides = [1, 1, 1]} : vector<2x8x128xf32> to vector<2x8x126xf32>
    %184 = vector.extract_strided_slice %182 {offsets = [0, 0, 0], sizes = [2, 8, 2], strides = [1, 1, 1]} : vector<2x8x128xf32> to vector<2x8x2xf32>
    %185 = tpu.concatenate %183, %184 in 2 : vector<2x8x126xf32>, vector<2x8x2xf32> -> vector<2x8x128xf32>
    %186 = arith.maximumf %182, %185 : vector<2x8x128xf32>
    %cst_33 = arith.constant 0.000000e+00 : f32
    %187 = vector.broadcast %cst_33 : f32 to vector<2x8x128xf32>
    %188 = arith.maximumf %186, %187 : vector<2x8x128xf32>
    %c0_34 = arith.constant 0 : index
    %c0_35 = arith.constant 0 : index
    %c16 = arith.constant 16 : index
    %c0_36 = arith.constant 0 : index
    %189 = vector.load %arg1[%c0_34, %c0_35, %c16, %c0_36] : memref<2x2x32x512xf32, #tpu.memory_space<vmem>>, vector<2x1x8x512xf32>
    %190 = vector.shape_cast %189 : vector<2x1x8x512xf32> to vector<2x8x512xf32>
    %c0_37 = arith.constant 0 : index
    %c1_38 = arith.constant 1 : index
    %c16_39 = arith.constant 16 : index
    %c0_40 = arith.constant 0 : index
    %191 = vector.load %arg1[%c0_37, %c1_38, %c16_39, %c0_40] : memref<2x2x32x512xf32, #tpu.memory_space<vmem>>, vector<2x1x8x512xf32>
    %192 = vector.shape_cast %191 : vector<2x1x8x512xf32> to vector<2x8x512xf32>
    %193 = vector.broadcast %0 : f32 to vector<2x8x512xf32>
    %194 = arith.mulf %193, %190 : vector<2x8x512xf32>
    %195 = vector.broadcast %1 : f32 to vector<2x8x512xf32>
    %196 = arith.mulf %195, %192 : vector<2x8x512xf32>
    %197 = arith.addf %194, %196 : vector<2x8x512xf32>
    %198 = vector.broadcast %4 : f32 to vector<2x8x512xf32>
    %199 = arith.addf %197, %198 : vector<2x8x512xf32>
    %200 = vector.extract_strided_slice %199 {offsets = [0, 0, 0], sizes = [2, 8, 128], strides = [1, 1, 1]} : vector<2x8x512xf32> to vector<2x8x128xf32>
    %201 = vector.extract_strided_slice %199 {offsets = [0, 0, 128], sizes = [2, 8, 128], strides = [1, 1, 1]} : vector<2x8x512xf32> to vector<2x8x128xf32>
    %202 = arith.maximumf %200, %201 : vector<2x8x128xf32>
    %203 = vector.extract_strided_slice %199 {offsets = [0, 0, 256], sizes = [2, 8, 128], strides = [1, 1, 1]} : vector<2x8x512xf32> to vector<2x8x128xf32>
    %204 = vector.extract_strided_slice %199 {offsets = [0, 0, 384], sizes = [2, 8, 128], strides = [1, 1, 1]} : vector<2x8x512xf32> to vector<2x8x128xf32>
    %205 = arith.maximumf %203, %204 : vector<2x8x128xf32>
    %206 = tpu.concatenate %202, %205 in 2 : vector<2x8x128xf32>, vector<2x8x128xf32> -> vector<2x8x256xf32>
    %207 = vector.extract_strided_slice %206 {offsets = [0, 0, 1], sizes = [2, 8, 255], strides = [1, 1, 1]} : vector<2x8x256xf32> to vector<2x8x255xf32>
    %208 = vector.extract_strided_slice %206 {offsets = [0, 0, 0], sizes = [2, 8, 1], strides = [1, 1, 1]} : vector<2x8x256xf32> to vector<2x8x1xf32>
    %209 = tpu.concatenate %207, %208 in 2 : vector<2x8x255xf32>, vector<2x8x1xf32> -> vector<2x8x256xf32>
    %210 = arith.maximumf %206, %209 : vector<2x8x256xf32>
    %cst_41 = arith.constant 0.000000e+00 : f32
    %211 = vector.broadcast %cst_41 : f32 to vector<2x8x256xf32>
    %212 = arith.maximumf %210, %211 : vector<2x8x256xf32>
    %213 = vector.broadcast %2 : f32 to vector<2x8x512xf32>
    %214 = arith.mulf %213, %190 : vector<2x8x512xf32>
    %215 = vector.broadcast %3 : f32 to vector<2x8x512xf32>
    %216 = arith.mulf %215, %192 : vector<2x8x512xf32>
    %217 = arith.addf %214, %216 : vector<2x8x512xf32>
    %218 = vector.broadcast %5 : f32 to vector<2x8x512xf32>
    %219 = arith.addf %217, %218 : vector<2x8x512xf32>
    %220 = vector.extract_strided_slice %219 {offsets = [0, 0, 0], sizes = [2, 8, 128], strides = [1, 1, 1]} : vector<2x8x512xf32> to vector<2x8x128xf32>
    %221 = vector.extract_strided_slice %219 {offsets = [0, 0, 128], sizes = [2, 8, 128], strides = [1, 1, 1]} : vector<2x8x512xf32> to vector<2x8x128xf32>
    %222 = arith.maximumf %220, %221 : vector<2x8x128xf32>
    %223 = vector.extract_strided_slice %219 {offsets = [0, 0, 256], sizes = [2, 8, 128], strides = [1, 1, 1]} : vector<2x8x512xf32> to vector<2x8x128xf32>
    %224 = vector.extract_strided_slice %219 {offsets = [0, 0, 384], sizes = [2, 8, 128], strides = [1, 1, 1]} : vector<2x8x512xf32> to vector<2x8x128xf32>
    %225 = arith.maximumf %223, %224 : vector<2x8x128xf32>
    %226 = tpu.concatenate %222, %225 in 2 : vector<2x8x128xf32>, vector<2x8x128xf32> -> vector<2x8x256xf32>
    %227 = vector.extract_strided_slice %226 {offsets = [0, 0, 1], sizes = [2, 8, 255], strides = [1, 1, 1]} : vector<2x8x256xf32> to vector<2x8x255xf32>
    %228 = vector.extract_strided_slice %226 {offsets = [0, 0, 0], sizes = [2, 8, 1], strides = [1, 1, 1]} : vector<2x8x256xf32> to vector<2x8x1xf32>
    %229 = tpu.concatenate %227, %228 in 2 : vector<2x8x255xf32>, vector<2x8x1xf32> -> vector<2x8x256xf32>
    %230 = arith.maximumf %226, %229 : vector<2x8x256xf32>
    %cst_42 = arith.constant 0.000000e+00 : f32
    %231 = vector.broadcast %cst_42 : f32 to vector<2x8x256xf32>
    %232 = arith.maximumf %230, %231 : vector<2x8x256xf32>
    %233 = vector.broadcast %6 : f32 to vector<2x8x256xf32>
    %234 = arith.mulf %233, %212 : vector<2x8x256xf32>
    %235 = vector.broadcast %7 : f32 to vector<2x8x256xf32>
    %236 = arith.mulf %235, %232 : vector<2x8x256xf32>
    %237 = arith.addf %234, %236 : vector<2x8x256xf32>
    %238 = vector.broadcast %10 : f32 to vector<2x8x256xf32>
    %239 = arith.addf %237, %238 : vector<2x8x256xf32>
    %240 = vector.extract_strided_slice %239 {offsets = [0, 0, 0], sizes = [2, 8, 128], strides = [1, 1, 1]} : vector<2x8x256xf32> to vector<2x8x128xf32>
    %241 = vector.extract_strided_slice %239 {offsets = [0, 0, 128], sizes = [2, 8, 128], strides = [1, 1, 1]} : vector<2x8x256xf32> to vector<2x8x128xf32>
    %242 = arith.maximumf %240, %241 : vector<2x8x128xf32>
    %243 = vector.extract_strided_slice %242 {offsets = [0, 0, 2], sizes = [2, 8, 126], strides = [1, 1, 1]} : vector<2x8x128xf32> to vector<2x8x126xf32>
    %244 = vector.extract_strided_slice %242 {offsets = [0, 0, 0], sizes = [2, 8, 2], strides = [1, 1, 1]} : vector<2x8x128xf32> to vector<2x8x2xf32>
    %245 = tpu.concatenate %243, %244 in 2 : vector<2x8x126xf32>, vector<2x8x2xf32> -> vector<2x8x128xf32>
    %246 = arith.maximumf %242, %245 : vector<2x8x128xf32>
    %cst_43 = arith.constant 0.000000e+00 : f32
    %247 = vector.broadcast %cst_43 : f32 to vector<2x8x128xf32>
    %248 = arith.maximumf %246, %247 : vector<2x8x128xf32>
    %249 = vector.broadcast %8 : f32 to vector<2x8x256xf32>
    %250 = arith.mulf %249, %212 : vector<2x8x256xf32>
    %251 = vector.broadcast %9 : f32 to vector<2x8x256xf32>
    %252 = arith.mulf %251, %232 : vector<2x8x256xf32>
    %253 = arith.addf %250, %252 : vector<2x8x256xf32>
    %254 = vector.broadcast %11 : f32 to vector<2x8x256xf32>
    %255 = arith.addf %253, %254 : vector<2x8x256xf32>
    %256 = vector.extract_strided_slice %255 {offsets = [0, 0, 0], sizes = [2, 8, 128], strides = [1, 1, 1]} : vector<2x8x256xf32> to vector<2x8x128xf32>
    %257 = vector.extract_strided_slice %255 {offsets = [0, 0, 128], sizes = [2, 8, 128], strides = [1, 1, 1]} : vector<2x8x256xf32> to vector<2x8x128xf32>
    %258 = arith.maximumf %256, %257 : vector<2x8x128xf32>
    %259 = vector.extract_strided_slice %258 {offsets = [0, 0, 2], sizes = [2, 8, 126], strides = [1, 1, 1]} : vector<2x8x128xf32> to vector<2x8x126xf32>
    %260 = vector.extract_strided_slice %258 {offsets = [0, 0, 0], sizes = [2, 8, 2], strides = [1, 1, 1]} : vector<2x8x128xf32> to vector<2x8x2xf32>
    %261 = tpu.concatenate %259, %260 in 2 : vector<2x8x126xf32>, vector<2x8x2xf32> -> vector<2x8x128xf32>
    %262 = arith.maximumf %258, %261 : vector<2x8x128xf32>
    %cst_44 = arith.constant 0.000000e+00 : f32
    %263 = vector.broadcast %cst_44 : f32 to vector<2x8x128xf32>
    %264 = arith.maximumf %262, %263 : vector<2x8x128xf32>
    %c0_45 = arith.constant 0 : index
    %c0_46 = arith.constant 0 : index
    %c24 = arith.constant 24 : index
    %c0_47 = arith.constant 0 : index
    %265 = vector.load %arg1[%c0_45, %c0_46, %c24, %c0_47] : memref<2x2x32x512xf32, #tpu.memory_space<vmem>>, vector<2x1x8x512xf32>
    %266 = vector.shape_cast %265 : vector<2x1x8x512xf32> to vector<2x8x512xf32>
    %c0_48 = arith.constant 0 : index
    %c1_49 = arith.constant 1 : index
    %c24_50 = arith.constant 24 : index
    %c0_51 = arith.constant 0 : index
    %267 = vector.load %arg1[%c0_48, %c1_49, %c24_50, %c0_51] : memref<2x2x32x512xf32, #tpu.memory_space<vmem>>, vector<2x1x8x512xf32>
    %268 = vector.shape_cast %267 : vector<2x1x8x512xf32> to vector<2x8x512xf32>
    %269 = vector.broadcast %0 : f32 to vector<2x8x512xf32>
    %270 = arith.mulf %269, %266 : vector<2x8x512xf32>
    %271 = vector.broadcast %1 : f32 to vector<2x8x512xf32>
    %272 = arith.mulf %271, %268 : vector<2x8x512xf32>
    %273 = arith.addf %270, %272 : vector<2x8x512xf32>
    %274 = vector.broadcast %4 : f32 to vector<2x8x512xf32>
    %275 = arith.addf %273, %274 : vector<2x8x512xf32>
    %276 = vector.extract_strided_slice %275 {offsets = [0, 0, 0], sizes = [2, 8, 128], strides = [1, 1, 1]} : vector<2x8x512xf32> to vector<2x8x128xf32>
    %277 = vector.extract_strided_slice %275 {offsets = [0, 0, 128], sizes = [2, 8, 128], strides = [1, 1, 1]} : vector<2x8x512xf32> to vector<2x8x128xf32>
    %278 = arith.maximumf %276, %277 : vector<2x8x128xf32>
    %279 = vector.extract_strided_slice %275 {offsets = [0, 0, 256], sizes = [2, 8, 128], strides = [1, 1, 1]} : vector<2x8x512xf32> to vector<2x8x128xf32>
    %280 = vector.extract_strided_slice %275 {offsets = [0, 0, 384], sizes = [2, 8, 128], strides = [1, 1, 1]} : vector<2x8x512xf32> to vector<2x8x128xf32>
    %281 = arith.maximumf %279, %280 : vector<2x8x128xf32>
    %282 = tpu.concatenate %278, %281 in 2 : vector<2x8x128xf32>, vector<2x8x128xf32> -> vector<2x8x256xf32>
    %283 = vector.extract_strided_slice %282 {offsets = [0, 0, 1], sizes = [2, 8, 255], strides = [1, 1, 1]} : vector<2x8x256xf32> to vector<2x8x255xf32>
    %284 = vector.extract_strided_slice %282 {offsets = [0, 0, 0], sizes = [2, 8, 1], strides = [1, 1, 1]} : vector<2x8x256xf32> to vector<2x8x1xf32>
    %285 = tpu.concatenate %283, %284 in 2 : vector<2x8x255xf32>, vector<2x8x1xf32> -> vector<2x8x256xf32>
    %286 = arith.maximumf %282, %285 : vector<2x8x256xf32>
    %cst_52 = arith.constant 0.000000e+00 : f32
    %287 = vector.broadcast %cst_52 : f32 to vector<2x8x256xf32>
    %288 = arith.maximumf %286, %287 : vector<2x8x256xf32>
    %289 = vector.broadcast %2 : f32 to vector<2x8x512xf32>
    %290 = arith.mulf %289, %266 : vector<2x8x512xf32>
    %291 = vector.broadcast %3 : f32 to vector<2x8x512xf32>
    %292 = arith.mulf %291, %268 : vector<2x8x512xf32>
    %293 = arith.addf %290, %292 : vector<2x8x512xf32>
    %294 = vector.broadcast %5 : f32 to vector<2x8x512xf32>
    %295 = arith.addf %293, %294 : vector<2x8x512xf32>
    %296 = vector.extract_strided_slice %295 {offsets = [0, 0, 0], sizes = [2, 8, 128], strides = [1, 1, 1]} : vector<2x8x512xf32> to vector<2x8x128xf32>
    %297 = vector.extract_strided_slice %295 {offsets = [0, 0, 128], sizes = [2, 8, 128], strides = [1, 1, 1]} : vector<2x8x512xf32> to vector<2x8x128xf32>
    %298 = arith.maximumf %296, %297 : vector<2x8x128xf32>
    %299 = vector.extract_strided_slice %295 {offsets = [0, 0, 256], sizes = [2, 8, 128], strides = [1, 1, 1]} : vector<2x8x512xf32> to vector<2x8x128xf32>
    %300 = vector.extract_strided_slice %295 {offsets = [0, 0, 384], sizes = [2, 8, 128], strides = [1, 1, 1]} : vector<2x8x512xf32> to vector<2x8x128xf32>
    %301 = arith.maximumf %299, %300 : vector<2x8x128xf32>
    %302 = tpu.concatenate %298, %301 in 2 : vector<2x8x128xf32>, vector<2x8x128xf32> -> vector<2x8x256xf32>
    %303 = vector.extract_strided_slice %302 {offsets = [0, 0, 1], sizes = [2, 8, 255], strides = [1, 1, 1]} : vector<2x8x256xf32> to vector<2x8x255xf32>
    %304 = vector.extract_strided_slice %302 {offsets = [0, 0, 0], sizes = [2, 8, 1], strides = [1, 1, 1]} : vector<2x8x256xf32> to vector<2x8x1xf32>
    %305 = tpu.concatenate %303, %304 in 2 : vector<2x8x255xf32>, vector<2x8x1xf32> -> vector<2x8x256xf32>
    %306 = arith.maximumf %302, %305 : vector<2x8x256xf32>
    %cst_53 = arith.constant 0.000000e+00 : f32
    %307 = vector.broadcast %cst_53 : f32 to vector<2x8x256xf32>
    %308 = arith.maximumf %306, %307 : vector<2x8x256xf32>
    %309 = vector.broadcast %6 : f32 to vector<2x8x256xf32>
    %310 = arith.mulf %309, %288 : vector<2x8x256xf32>
    %311 = vector.broadcast %7 : f32 to vector<2x8x256xf32>
    %312 = arith.mulf %311, %308 : vector<2x8x256xf32>
    %313 = arith.addf %310, %312 : vector<2x8x256xf32>
    %314 = vector.broadcast %10 : f32 to vector<2x8x256xf32>
    %315 = arith.addf %313, %314 : vector<2x8x256xf32>
    %316 = vector.extract_strided_slice %315 {offsets = [0, 0, 0], sizes = [2, 8, 128], strides = [1, 1, 1]} : vector<2x8x256xf32> to vector<2x8x128xf32>
    %317 = vector.extract_strided_slice %315 {offsets = [0, 0, 128], sizes = [2, 8, 128], strides = [1, 1, 1]} : vector<2x8x256xf32> to vector<2x8x128xf32>
    %318 = arith.maximumf %316, %317 : vector<2x8x128xf32>
    %319 = vector.extract_strided_slice %318 {offsets = [0, 0, 2], sizes = [2, 8, 126], strides = [1, 1, 1]} : vector<2x8x128xf32> to vector<2x8x126xf32>
    %320 = vector.extract_strided_slice %318 {offsets = [0, 0, 0], sizes = [2, 8, 2], strides = [1, 1, 1]} : vector<2x8x128xf32> to vector<2x8x2xf32>
    %321 = tpu.concatenate %319, %320 in 2 : vector<2x8x126xf32>, vector<2x8x2xf32> -> vector<2x8x128xf32>
    %322 = arith.maximumf %318, %321 : vector<2x8x128xf32>
    %cst_54 = arith.constant 0.000000e+00 : f32
    %323 = vector.broadcast %cst_54 : f32 to vector<2x8x128xf32>
    %324 = arith.maximumf %322, %323 : vector<2x8x128xf32>
    %325 = vector.broadcast %8 : f32 to vector<2x8x256xf32>
    %326 = arith.mulf %325, %288 : vector<2x8x256xf32>
    %327 = vector.broadcast %9 : f32 to vector<2x8x256xf32>
    %328 = arith.mulf %327, %308 : vector<2x8x256xf32>
    %329 = arith.addf %326, %328 : vector<2x8x256xf32>
    %330 = vector.broadcast %11 : f32 to vector<2x8x256xf32>
    %331 = arith.addf %329, %330 : vector<2x8x256xf32>
    %332 = vector.extract_strided_slice %331 {offsets = [0, 0, 0], sizes = [2, 8, 128], strides = [1, 1, 1]} : vector<2x8x256xf32> to vector<2x8x128xf32>
    %333 = vector.extract_strided_slice %331 {offsets = [0, 0, 128], sizes = [2, 8, 128], strides = [1, 1, 1]} : vector<2x8x256xf32> to vector<2x8x128xf32>
    %334 = arith.maximumf %332, %333 : vector<2x8x128xf32>
    %335 = vector.extract_strided_slice %334 {offsets = [0, 0, 2], sizes = [2, 8, 126], strides = [1, 1, 1]} : vector<2x8x128xf32> to vector<2x8x126xf32>
    %336 = vector.extract_strided_slice %334 {offsets = [0, 0, 0], sizes = [2, 8, 2], strides = [1, 1, 1]} : vector<2x8x128xf32> to vector<2x8x2xf32>
    %337 = tpu.concatenate %335, %336 in 2 : vector<2x8x126xf32>, vector<2x8x2xf32> -> vector<2x8x128xf32>
    %338 = arith.maximumf %334, %337 : vector<2x8x128xf32>
    %cst_55 = arith.constant 0.000000e+00 : f32
    %339 = vector.broadcast %cst_55 : f32 to vector<2x8x128xf32>
    %340 = arith.maximumf %338, %339 : vector<2x8x128xf32>
    %341 = tpu.concatenate %96, %172, %248, %324 in 1 : vector<2x8x128xf32>, vector<2x8x128xf32>, vector<2x8x128xf32>, vector<2x8x128xf32> -> vector<2x32x128xf32>
    %342 = tpu.concatenate %112, %188, %264, %340 in 1 : vector<2x8x128xf32>, vector<2x8x128xf32>, vector<2x8x128xf32>, vector<2x8x128xf32> -> vector<2x32x128xf32>
    %c12 = arith.constant 12 : index
    %343 = memref.load %arg2[%c12] : memref<36xf32, #tpu.memory_space<smem>>
    %344 = vector.broadcast %343 : f32 to vector<2x32x128xf32>
    %345 = arith.mulf %344, %341 : vector<2x32x128xf32>
    %c20 = arith.constant 20 : index
    %346 = memref.load %arg2[%c20] : memref<36xf32, #tpu.memory_space<smem>>
    %347 = vector.broadcast %346 : f32 to vector<2x32x128xf32>
    %348 = arith.mulf %347, %342 : vector<2x32x128xf32>
    %349 = arith.addf %345, %348 : vector<2x32x128xf32>
    %350 = vector.broadcast %12 : f32 to vector<2x32x128xf32>
    %351 = arith.addf %349, %350 : vector<2x32x128xf32>
    %cst_56 = arith.constant 0.000000e+00 : f32
    %352 = vector.broadcast %cst_56 : f32 to vector<2x32x128xf32>
    %353 = arith.maximumf %351, %352 : vector<2x32x128xf32>
    %c16_57 = arith.constant 16 : index
    %354 = memref.load %arg2[%c16_57] : memref<36xf32, #tpu.memory_space<smem>>
    %355 = vector.broadcast %354 : f32 to vector<2x32x128xf32>
    %356 = arith.mulf %355, %341 : vector<2x32x128xf32>
    %c24_58 = arith.constant 24 : index
    %357 = memref.load %arg2[%c24_58] : memref<36xf32, #tpu.memory_space<smem>>
    %358 = vector.broadcast %357 : f32 to vector<2x32x128xf32>
    %359 = arith.mulf %358, %342 : vector<2x32x128xf32>
    %360 = arith.addf %356, %359 : vector<2x32x128xf32>
    %361 = vector.broadcast %13 : f32 to vector<2x32x128xf32>
    %362 = arith.addf %360, %361 : vector<2x32x128xf32>
    %cst_59 = arith.constant 0.000000e+00 : f32
    %363 = vector.broadcast %cst_59 : f32 to vector<2x32x128xf32>
    %364 = arith.maximumf %362, %363 : vector<2x32x128xf32>
    %365 = vector.broadcast %14 : f32 to vector<2x32x128xf32>
    %366 = arith.mulf %365, %353 : vector<2x32x128xf32>
    %367 = vector.broadcast %15 : f32 to vector<2x32x128xf32>
    %368 = arith.mulf %367, %364 : vector<2x32x128xf32>
    %369 = arith.addf %366, %368 : vector<2x32x128xf32>
    %c13 = arith.constant 13 : index
    %370 = memref.load %arg2[%c13] : memref<36xf32, #tpu.memory_space<smem>>
    %371 = vector.broadcast %370 : f32 to vector<2x32x128xf32>
    %372 = arith.mulf %371, %341 : vector<2x32x128xf32>
    %c21 = arith.constant 21 : index
    %373 = memref.load %arg2[%c21] : memref<36xf32, #tpu.memory_space<smem>>
    %374 = vector.broadcast %373 : f32 to vector<2x32x128xf32>
    %375 = arith.mulf %374, %342 : vector<2x32x128xf32>
    %376 = arith.addf %372, %375 : vector<2x32x128xf32>
    %377 = vector.broadcast %12 : f32 to vector<2x32x128xf32>
    %378 = arith.addf %376, %377 : vector<2x32x128xf32>
    %cst_60 = arith.constant 0.000000e+00 : f32
    %379 = vector.broadcast %cst_60 : f32 to vector<2x32x128xf32>
    %380 = arith.maximumf %378, %379 : vector<2x32x128xf32>
    %c17 = arith.constant 17 : index
    %381 = memref.load %arg2[%c17] : memref<36xf32, #tpu.memory_space<smem>>
    %382 = vector.broadcast %381 : f32 to vector<2x32x128xf32>
    %383 = arith.mulf %382, %341 : vector<2x32x128xf32>
    %c25 = arith.constant 25 : index
    %384 = memref.load %arg2[%c25] : memref<36xf32, #tpu.memory_space<smem>>
    %385 = vector.broadcast %384 : f32 to vector<2x32x128xf32>
    %386 = arith.mulf %385, %342 : vector<2x32x128xf32>
    %387 = arith.addf %383, %386 : vector<2x32x128xf32>
    %388 = vector.broadcast %13 : f32 to vector<2x32x128xf32>
    %389 = arith.addf %387, %388 : vector<2x32x128xf32>
    %cst_61 = arith.constant 0.000000e+00 : f32
    %390 = vector.broadcast %cst_61 : f32 to vector<2x32x128xf32>
    %391 = arith.maximumf %389, %390 : vector<2x32x128xf32>
    %392 = vector.broadcast %14 : f32 to vector<2x32x128xf32>
    %393 = arith.mulf %392, %380 : vector<2x32x128xf32>
    %394 = vector.broadcast %15 : f32 to vector<2x32x128xf32>
    %395 = arith.mulf %394, %391 : vector<2x32x128xf32>
    %396 = arith.addf %393, %395 : vector<2x32x128xf32>
    %397 = tpu.concatenate %369, %396 in 2 : vector<2x32x128xf32>, vector<2x32x128xf32> -> vector<2x32x256xf32>
    %c14 = arith.constant 14 : index
    %398 = memref.load %arg2[%c14] : memref<36xf32, #tpu.memory_space<smem>>
    %399 = vector.broadcast %398 : f32 to vector<2x32x128xf32>
    %400 = arith.mulf %399, %341 : vector<2x32x128xf32>
    %c22 = arith.constant 22 : index
    %401 = memref.load %arg2[%c22] : memref<36xf32, #tpu.memory_space<smem>>
    %402 = vector.broadcast %401 : f32 to vector<2x32x128xf32>
    %403 = arith.mulf %402, %342 : vector<2x32x128xf32>
    %404 = arith.addf %400, %403 : vector<2x32x128xf32>
    %405 = vector.broadcast %12 : f32 to vector<2x32x128xf32>
    %406 = arith.addf %404, %405 : vector<2x32x128xf32>
    %cst_62 = arith.constant 0.000000e+00 : f32
    %407 = vector.broadcast %cst_62 : f32 to vector<2x32x128xf32>
    %408 = arith.maximumf %406, %407 : vector<2x32x128xf32>
    %c18 = arith.constant 18 : index
    %409 = memref.load %arg2[%c18] : memref<36xf32, #tpu.memory_space<smem>>
    %410 = vector.broadcast %409 : f32 to vector<2x32x128xf32>
    %411 = arith.mulf %410, %341 : vector<2x32x128xf32>
    %c26 = arith.constant 26 : index
    %412 = memref.load %arg2[%c26] : memref<36xf32, #tpu.memory_space<smem>>
    %413 = vector.broadcast %412 : f32 to vector<2x32x128xf32>
    %414 = arith.mulf %413, %342 : vector<2x32x128xf32>
    %415 = arith.addf %411, %414 : vector<2x32x128xf32>
    %416 = vector.broadcast %13 : f32 to vector<2x32x128xf32>
    %417 = arith.addf %415, %416 : vector<2x32x128xf32>
    %cst_63 = arith.constant 0.000000e+00 : f32
    %418 = vector.broadcast %cst_63 : f32 to vector<2x32x128xf32>
    %419 = arith.maximumf %417, %418 : vector<2x32x128xf32>
    %420 = vector.broadcast %14 : f32 to vector<2x32x128xf32>
    %421 = arith.mulf %420, %408 : vector<2x32x128xf32>
    %422 = vector.broadcast %15 : f32 to vector<2x32x128xf32>
    %423 = arith.mulf %422, %419 : vector<2x32x128xf32>
    %424 = arith.addf %421, %423 : vector<2x32x128xf32>
    %c15 = arith.constant 15 : index
    %425 = memref.load %arg2[%c15] : memref<36xf32, #tpu.memory_space<smem>>
    %426 = vector.broadcast %425 : f32 to vector<2x32x128xf32>
    %427 = arith.mulf %426, %341 : vector<2x32x128xf32>
    %c23 = arith.constant 23 : index
    %428 = memref.load %arg2[%c23] : memref<36xf32, #tpu.memory_space<smem>>
    %429 = vector.broadcast %428 : f32 to vector<2x32x128xf32>
    %430 = arith.mulf %429, %342 : vector<2x32x128xf32>
    %431 = arith.addf %427, %430 : vector<2x32x128xf32>
    %432 = vector.broadcast %12 : f32 to vector<2x32x128xf32>
    %433 = arith.addf %431, %432 : vector<2x32x128xf32>
    %cst_64 = arith.constant 0.000000e+00 : f32
    %434 = vector.broadcast %cst_64 : f32 to vector<2x32x128xf32>
    %435 = arith.maximumf %433, %434 : vector<2x32x128xf32>
    %c19 = arith.constant 19 : index
    %436 = memref.load %arg2[%c19] : memref<36xf32, #tpu.memory_space<smem>>
    %437 = vector.broadcast %436 : f32 to vector<2x32x128xf32>
    %438 = arith.mulf %437, %341 : vector<2x32x128xf32>
    %c27 = arith.constant 27 : index
    %439 = memref.load %arg2[%c27] : memref<36xf32, #tpu.memory_space<smem>>
    %440 = vector.broadcast %439 : f32 to vector<2x32x128xf32>
    %441 = arith.mulf %440, %342 : vector<2x32x128xf32>
    %442 = arith.addf %438, %441 : vector<2x32x128xf32>
    %443 = vector.broadcast %13 : f32 to vector<2x32x128xf32>
    %444 = arith.addf %442, %443 : vector<2x32x128xf32>
    %cst_65 = arith.constant 0.000000e+00 : f32
    %445 = vector.broadcast %cst_65 : f32 to vector<2x32x128xf32>
    %446 = arith.maximumf %444, %445 : vector<2x32x128xf32>
    %447 = vector.broadcast %14 : f32 to vector<2x32x128xf32>
    %448 = arith.mulf %447, %435 : vector<2x32x128xf32>
    %449 = vector.broadcast %15 : f32 to vector<2x32x128xf32>
    %450 = arith.mulf %449, %446 : vector<2x32x128xf32>
    %451 = arith.addf %448, %450 : vector<2x32x128xf32>
    %452 = tpu.concatenate %424, %451 in 2 : vector<2x32x128xf32>, vector<2x32x128xf32> -> vector<2x32x256xf32>
    %453 = tpu.concatenate %397, %452 in 1 : vector<2x32x256xf32>, vector<2x32x256xf32> -> vector<2x64x256xf32>
    %454 = vector.shape_cast %453 : vector<2x64x256xf32> to vector<128x256xf32>
    %455 = arith.truncf %454 : vector<128x256xf32> to vector<128x256xbf16>
    %456 = arith.extf %455 : vector<128x256xbf16> to vector<128x256xf32>
    %457 = arith.subf %454, %456 : vector<128x256xf32>
    %458 = arith.truncf %457 : vector<128x256xf32> to vector<128x256xbf16>
    %c0_66 = arith.constant 0 : index
    %c0_67 = arith.constant 0 : index
    %459 = vector.load %arg3[%c0_66, %c0_67] : memref<256x64xbf16, #tpu.memory_space<vmem>>, vector<256x64xbf16>
    %cst_68 = arith.constant dense<0.000000e+00> : vector<128x64xf32>
    %460 = tpu.matmul %455, %459, %cst_68 {dimension_numbers = #tpu.dot_dimension_numbers<[1], [0], [0], [1], [0, 0, 1, 1], [], []>} : vector<128x256xbf16>, vector<256x64xbf16>, vector<128x64xf32> -> vector<128x64xf32>
    %cst_69 = arith.constant dense<0.000000e+00> : vector<128x64xf32>
    %461 = tpu.matmul %458, %459, %cst_69 {dimension_numbers = #tpu.dot_dimension_numbers<[1], [0], [0], [1], [0, 0, 1, 1], [], []>} : vector<128x256xbf16>, vector<256x64xbf16>, vector<128x64xf32> -> vector<128x64xf32>
    %462 = arith.addf %460, %461 : vector<128x64xf32>
    %463 = vector.broadcast %16 : f32 to vector<128x64xf32>
    %464 = arith.addf %462, %463 : vector<128x64xf32>
    %465 = vector.shape_cast %464 : vector<128x64xf32> to vector<2x2x32x64xf32>
    %466 = vector.extract_strided_slice %465 {offsets = [0, 0, 0, 0], sizes = [2, 1, 32, 64], strides = [1, 1, 1, 1]} : vector<2x2x32x64xf32> to vector<2x1x32x64xf32>
    %467 = vector.shape_cast %466 : vector<2x1x32x64xf32> to vector<2x32x64xf32>
    %468 = vector.extract_strided_slice %465 {offsets = [0, 1, 0, 0], sizes = [2, 1, 32, 64], strides = [1, 1, 1, 1]} : vector<2x2x32x64xf32> to vector<2x1x32x64xf32>
    %469 = vector.shape_cast %468 : vector<2x1x32x64xf32> to vector<2x32x64xf32>
    %470 = tpu.concatenate %467, %469 in 2 : vector<2x32x64xf32>, vector<2x32x64xf32> -> vector<2x32x128xf32>
    %c0_70 = arith.constant 0 : index
    %c0_71 = arith.constant 0 : index
    %c0_72 = arith.constant 0 : index
    %471 = vector.load %arg5[%c0_70, %c0_71, %c0_72] : memref<2x32x128xf32, #tpu.memory_space<vmem>>, vector<2x32x128xf32>
    tpu.vector_store %arg5[%c0_70, %c0_71, %c0_72], %470 {strides = array<i32>} : memref<2x32x128xf32, #tpu.memory_space<vmem>>, vector<2x32x128xf32>,
    return
  }
  func.func @transform_0(%arg0: i32) -> (i32, i32, i32, i32) {
    %c0_i32 = arith.constant 0 : i32
    %c0_i32_0 = arith.constant 0 : i32
    %c0_i32_1 = arith.constant 0 : i32
    %c0_i32_2 = arith.constant 0 : i32
    return %arg0, %c0_i32, %c0_i32_0, %c0_i32_1 : i32, i32, i32, i32
  }
  func.func @transform_1(%arg0: i32) -> i32 {
    %c0_i32 = arith.constant 0 : i32
    %c0_i32_0 = arith.constant 0 : i32
    return %c0_i32 : i32
  }
  func.func @transform_2(%arg0: i32) -> (i32, i32) {
    %c0_i32 = arith.constant 0 : i32
    %c0_i32_0 = arith.constant 0 : i32
    %c0_i32_1 = arith.constant 0 : i32
    return %c0_i32, %c0_i32_0 : i32, i32
  }
  func.func @transform_3(%arg0: i32) -> (i32, i32, i32) {
    %c0_i32 = arith.constant 0 : i32
    %c0_i32_0 = arith.constant 0 : i32
    %c0_i32_1 = arith.constant 0 : i32
    return %arg0, %c0_i32, %c0_i32_0 : i32, i32, i32
  }
  func.func @transform_4(%arg0: i32) -> (i32, i32, i32) {
    %c0_i32 = arith.constant 0 : i32
    %c0_i32_0 = arith.constant 0 : i32
    %c0_i32_1 = arith.constant 0 : i32
    return %arg0, %c0_i32, %c0_i32_0 : i32, i32, i32
  }
}

</mosaic_0001>

<llo_original>
// kernel: tpu_custom_call.1
$region0: #{tpu_custom_call.1}
  #allocation0 [shape = 'u32[]', space=smem, size = 0x4, offset = 0x4, fixed_abs, tag = 'smem constant byte address 0x4 - core index']
  #allocation1 [shape = 'u32[144,128]{1,0:T(1,128)}', space=vmem, size = 0x12000, scoped, tag = 'internal scratch']
  %s0 = inlined_call_operand.hbm [shape: f32[8,2,32,512], index: 0, kind: input, shape index: {}]
  %s1 = inlined_call_operand.vmem [shape: f32[36], index: 1, kind: input, shape index: {}]
  %s2 = inlined_call_operand.vmem [shape: bf16[256,64], index: 2, kind: input, shape index: {}]
  %s3 = inlined_call_operand.hbm [shape: f32[8,16,256], index: 3, kind: output, shape index: {0}]
  %s4 = inlined_call_operand.hbm [shape: f32[8,32,128], index: 4, kind: output, shape index: {1}]
  %5 = xla_tuple %s3, %s4
  %s6 = sld [smem:[#allocation0]]
  $region61: #{tpu_custom_call.1} parent=0
    _
  %s8 = ssub.s32 1, %s6
  %s9 = scalar_select 0, %s8, %s6
  $region1: #{tpu_custom_call.1} parent=0
    #allocation2 [shape = 'u8[524288]{0}', space=vmem, size = 0x80000, scoped, tag = 'input window, operand 0']
    #allocation3 [shape = 's32[2]{0}', space=sflag, size = 0x8, scoped, tag = 'scoped memory for tpu_custom_call.1']
    #allocation4 [shape = 's32[2]{0}', space=sflag, size = 0x8, scoped, tag = 'scoped memory for tpu_custom_call.1']
    #allocation5 [shape = 's32[2]{0}', space=sflag, size = 0x8, scoped, tag = 'scoped memory for tpu_custom_call.1']
    #allocation6 [shape = 'u8[512]{0}', space=smem, size = 0x200, scoped, tag = 'input window, operand 1, single buffered']
    #allocation7 [shape = 'u8[65536]{0}', space=vmem, size = 0x10000, scoped, tag = 'output window, operand 0']
    #allocation8 [shape = 'u8[65536]{0}', space=vmem, size = 0x10000, scoped, tag = 'output window, operand 1']
    #allocation9 [shape = 's32[2]{0}', space=sflag, size = 0x8, scoped, tag = 'scoped memory for tpu_custom_call.1']
    %10 = vsyncpa [#allocation3], 0
    %s11 = scalar_lea.sflag [#allocation3], 1
    %12 = vsyncpa %s11, 0
    %13 = vsyncpa [#allocation5], 0
    %14 = vsyncpa [#allocation4], 0
    %s15 = scalar_lea.sflag [#allocation4], 1
    %16 = vsyncpa %s15, 0
    %17 = vsyncpa [#allocation9], 0
    %s18 = scalar_lea.sflag [#allocation9], 1
    %19 = vsyncpa %s18, 0
    loop: start=0, step=1, limit=6
    $region2: #{tpu_custom_call.1} parent=1 // loop_pre_header
      _
    $region3: #{tpu_custom_call.1} parent=1 // loop_header
      %s21 = sphi 0, %s25
      %p22 = scmp.ge.s32.totalorder %s21, 6
      %s31 = sphi 0, %s33
      %s34 = sphi 0, %s31
      %s35 = sphi 0, %s34
      %s51 = sphi 0, %s35
      %s55 = sphi 0, %s55
      %s57 = sphi 0, %s55
      %s58 = sphi 0, %s57
      %s72 = sphi 0, %s58
      %s76 = sphi 0, %s76
      %s78 = sphi 0, %s76
      %s79 = sphi 0, %s78
      %s93 = sphi 0, %s79
      %s99 = sphi 0, %s101
      %s102 = sphi 0, %s99
      %s103 = sphi 0, %s102
      %s119 = sphi 0, %s103
      %s125 = sphi 0, %s127
      %s128 = sphi 0, %s125
      %s129 = sphi 0, %s128
      %s145 = sphi 0, %s129
    $region4: #{tpu_custom_call.1} parent=1 // loop_header_branch
      %24 = sbr.rel (%p22) target = $region8
    $region5: #{tpu_custom_call.1} parent=1 // loop_body
      %s26 = ssub.s32 %s21, 1
      %s27 = ssub.s32 %s21, 2
      %s28 = sadd.s32 %s21, 1
      %s29 = ssub.s32 %s21, %s28
      %p30 = scmp.eq.s32.totalorder %s29, 0
      %s32 = sadd.s32 %s31, 1
      %s33 = scalar_select %p30, %s31, %s32
      %p36 = pneg %p30
      %p37 = scmp.eq.s32.totalorder %s21, 3
      %p38 = por %p36, %p37
      %p39 = scmp.ne.s32.totalorder %s31, %s34
      %p40 = scmp.eq.s32.totalorder %s21, 0
      %p41 = por %p39, %p40
      %p42 = scmp.ne.s32.totalorder %s31, %s34
      %p43 = scmp.eq.s32.totalorder %s26, 3
      %p44 = por %p42, %p43
      %p45 = scmp.ne.s32.totalorder %s34, %s35
      %p46 = scmp.eq.s32.totalorder %s26, 0
      %p47 = por %p45, %p46
      %p48 = scmp.ne.s32.totalorder %s34, %s35
      %p49 = scmp.eq.s32.totalorder %s27, 3
      %p50 = por %p48, %p49
      %p52 = scmp.ne.s32.totalorder %s35, %s51
      %p53 = scmp.eq.s32.totalorder %s27, 0
      %p54 = por %p52, %p53
      %s56 = sadd.s32 %s55, 1
      %p59 = scmp.eq.s32.totalorder %s21, 3
      %p60 = scmp.ne.s32.totalorder %s55, %s57
      %p61 = scmp.eq.s32.totalorder %s21, 0
      %p62 = por %p60, %p61
      %p63 = scmp.ne.s32.totalorder %s55, %s57
      %p64 = scmp.eq.s32.totalorder %s26, 3
      %p65 = por %p63, %p64
      %p66 = scmp.ne.s32.totalorder %s57, %s58
      %p67 = scmp.eq.s32.totalorder %s26, 0
      %p68 = por %p66, %p67
      %p69 = scmp.ne.s32.totalorder %s57, %s58
      %p70 = scmp.eq.s32.totalorder %s27, 3
      %p71 = por %p69, %p70
      %p73 = scmp.ne.s32.totalorder %s58, %s72
      %p74 = scmp.eq.s32.totalorder %s27, 0
      %p75 = por %p73, %p74
      %s77 = sadd.s32 %s76, 1
      %p80 = scmp.eq.s32.totalorder %s21, 3
      %p81 = scmp.ne.s32.totalorder %s76, %s78
      %p82 = scmp.eq.s32.totalorder %s21, 0
      %p83 = por %p81, %p82
      %p84 = scmp.ne.s32.totalorder %s76, %s78
      %p85 = scmp.eq.s32.totalorder %s26, 3
      %p86 = por %p84, %p85
      %p87 = scmp.ne.s32.totalorder %s78, %s79
      %p88 = scmp.eq.s32.totalorder %s26, 0
      %p89 = por %p87, %p88
      %p90 = scmp.ne.s32.totalorder %s78, %s79
      %p91 = scmp.eq.s32.totalorder %s27, 3
      %p92 = por %p90, %p91
      %p94 = scmp.ne.s32.totalorder %s79, %s93
      %p95 = scmp.eq.s32.totalorder %s27, 0
      %p96 = por %p94, %p95
      %s97 = ssub.s32 %s21, %s28
      %p98 = scmp.eq.s32.totalorder %s97, 0
      %s100 = sadd.s32 %s99, 1
      %s101 = scalar_select %p98, %s99, %s100
      %p104 = pneg %p98
      %p105 = scmp.eq.s32.totalorder %s21, 3
      %p106 = por %p104, %p105
      %p107 = scmp.ne.s32.totalorder %s99, %s102
      %p108 = scmp.eq.s32.totalorder %s21, 0
      %p109 = por %p107, %p108
      %p110 = scmp.ne.s32.totalorder %s99, %s102
      %p111 = scmp.eq.s32.totalorder %s26, 3
      %p112 = por %p110, %p111
      %p113 = scmp.ne.s32.totalorder %s102, %s103
      %p114 = scmp.eq.s32.totalorder %s26, 0
      %p115 = por %p113, %p114
      %p116 = scmp.ne.s32.totalorder %s102, %s103
      %p117 = scmp.eq.s32.totalorder %s27, 3
      %p118 = por %p116, %p117
      %p120 = scmp.ne.s32.totalorder %s103, %s119
      %p121 = scmp.eq.s32.totalorder %s27, 0
      %p122 = por %p120, %p121
      %s123 = ssub.s32 %s21, %s28
      %p124 = scmp.eq.s32.totalorder %s123, 0
      %s126 = sadd.s32 %s125, 1
      %s127 = scalar_select %p124, %s125, %s126
      %p130 = pneg %p124
      %p131 = scmp.eq.s32.totalorder %s21, 3
      %p132 = por %p130, %p131
      %p133 = scmp.ne.s32.totalorder %s125, %s128
      %p134 = scmp.eq.s32.totalorder %s21, 0
      %p135 = por %p133, %p134
      %p136 = scmp.ne.s32.totalorder %s125, %s128
      %p137 = scmp.eq.s32.totalorder %s26, 3
      %p138 = por %p136, %p137
      %p139 = scmp.ne.s32.totalorder %s128, %s129
      %p140 = scmp.eq.s32.totalorder %s26, 0
      %p141 = por %p139, %p140
      %p142 = scmp.ne.s32.totalorder %s128, %s129
      %p143 = scmp.eq.s32.totalorder %s27, 3
      %p144 = por %p142, %p143
      %p146 = scmp.ne.s32.totalorder %s129, %s145
      %p147 = scmp.eq.s32.totalorder %s27, 0
      %p148 = por %p146, %p147
      %p149 = scmp.le.s32.totalorder 1, %s21
      %p150 = scmp.lt.s32.totalorder %s21, 5
      %p151 = pnand %p149, %p150
      %p152 = pneg %p151
      // Predicated region
      $region9: #{tpu_custom_call.1} parent=5 // pred_check
        _
      $region10: #{tpu_custom_call.1} parent=5 // pred_check_branch
        %154 = sbr.rel (%p151) target = $region12
      $region11: #{tpu_custom_call.1} parent=5 // pred_region
        %s155 = ssub.s32 %s21, 1
        // Predicated region
        $region13: #{tpu_custom_call.1} parent=11 // pred_check
          %p156 = pneg %p68
        $region14: #{tpu_custom_call.1} parent=11 // pred_check_branch
          %158 = sbr.rel (%p156) target = $region16
        $region15: #{tpu_custom_call.1} parent=11 // pred_region
          %s160 = ssub.s32 16, 16
          %161 = vsyncadd [#allocation5], %s160
          %s163 = sshll.u32 %s1, 4
          %s164 = int_to_ptr.vmem [resolvable:$true] %s163
          %166 = dma.vmem_to_smem %s164, 16, [#allocation6], [#allocation5]
        $region16: #{tpu_custom_call.1} parent=11 // pred_fallthru
          _
        // Predicated region
        $region17: #{tpu_custom_call.1} parent=11 // pred_check
          %p167 = pneg %p89
        $region18: #{tpu_custom_call.1} parent=11 // pred_check_branch
          %169 = sbr.rel (%p167) target = $region20
        $region19: #{tpu_custom_call.1} parent=11 // pred_region
          _
        $region20: #{tpu_custom_call.1} parent=11 // pred_fallthru
          _
      $region12: #{tpu_custom_call.1} parent=5 // pred_fallthru
        _
      %p170 = scmp.lt.s32.totalorder %s21, 4
      // Predicated region
      $region21: #{tpu_custom_call.1} parent=5 // pred_check
        %p171 = pneg %p170
      $region22: #{tpu_custom_call.1} parent=5 // pred_check_branch
        %173 = sbr.rel (%p171) target = $region24
      $region23: #{tpu_custom_call.1} parent=5 // pred_region
        // Predicated region
        $region25: #{tpu_custom_call.1} parent=23 // pred_check
          %p174 = pneg %p41
        $region26: #{tpu_custom_call.1} parent=23 // pred_check_branch
          %176 = sbr.rel (%p174) target = $region28
        $region27: #{tpu_custom_call.1} parent=23 // pred_region
          %s177 = sand.u32 %s31, 1
          %s178 = scalar_lea.sflag [#allocation3], %s177
          %s179 = sand.u32 %s31, 1
          %s180 = smul.addr %s179, 512
          %s181 = scalar_lea.vmem [#allocation2], %s180
          %s182 = smul.u32 2, %s21
          %s184 = ssub.s32 8192, 8192
          %185 = vsyncadd %s178, %s184
          %s186 = smul.addr %s182, 32
          %s187 = smul.addr %s186, 128
          %s188 = scalar_lea.hbm %s0, %s187
          %s189 = sshll.u32 %s181, 4
          %s190 = int_to_ptr.vmem [resolvable:$true] %s189
          %195 = dma.hbm_to_vmem [thread:$0]  %s188, 8192, %s190, %s178, 512, 512, 32
        $region28: #{tpu_custom_call.1} parent=23 // pred_fallthru
          _
      $region24: #{tpu_custom_call.1} parent=5 // pred_fallthru
        _
      %p196 = scmp.le.s32.totalorder 1, %s21
      %p197 = scmp.lt.s32.totalorder %s21, 5
      %p198 = pnand %p196, %p197
      %p199 = pneg %p198
      // Predicated region
      $region29: #{tpu_custom_call.1} parent=5 // pred_check
        _
      $region30: #{tpu_custom_call.1} parent=5 // pred_check_branch
        %201 = sbr.rel (%p198) target = $region32
      $region31: #{tpu_custom_call.1} parent=5 // pred_region
        %s202 = ssub.s32 %s21, 1
        %s203 = sand.u32 %s34, 1
        %s204 = scalar_lea.sflag [#allocation3], %s203
        %s205 = sand.u32 %s34, 1
        %s206 = smul.addr %s205, 512
        %s207 = scalar_lea.vmem [#allocation2], %s206
        // Predicated region
        $region33: #{tpu_custom_call.1} parent=31 // pred_check
          %p208 = pneg %p47
        $region34: #{tpu_custom_call.1} parent=31 // pred_check_branch
          %210 = sbr.rel (%p208) target = $region36
        $region35: #{tpu_custom_call.1} parent=31 // pred_region
          %211 = dma.done %s204, 8192
        $region36: #{tpu_custom_call.1} parent=31 // pred_fallthru
          _
        // Predicated region
        $region37: #{tpu_custom_call.1} parent=31 // pred_check
          %p212 = pneg %p68
        $region38: #{tpu_custom_call.1} parent=31 // pred_check_branch
          %214 = sbr.rel (%p212) target = $region40
        $region39: #{tpu_custom_call.1} parent=31 // pred_region
          %215 = dma.done [#allocation5], 16
        $region40: #{tpu_custom_call.1} parent=31 // pred_fallthru
          _
        %216 = sfence
        %s217 = sand.u32 %s34, 1
        %s218 = scalar_lea.sflag [#allocation3], %s217
        %s219 = sand.u32 %s34, 1
        %s220 = smul.addr %s219, 512
        %s221 = scalar_lea.vmem [#allocation2], %s220
        %p222 = pneg %p47
        %p223 = pneg %p44
        %p224 = pneg %p68
        %p225 = pneg %p65
        %p226 = pneg %p89
        %p227 = pneg %p86
        %p228 = pneg %p115
        %p229 = pneg %p112
        %s230 = sand.u32 %s102, 1
        %s231 = scalar_lea.sflag [#allocation4], %s230
        %s232 = sand.u32 %s102, 1
        %s233 = smul.addr %s232, 64
        %s234 = scalar_lea.vmem [#allocation7], %s233
        %p235 = pneg %p141
        %p236 = pneg %p138
        %s237 = sand.u32 %s128, 1
        %s238 = scalar_lea.sflag [#allocation9], %s237
        %s239 = sand.u32 %s128, 1
        %s240 = smul.addr %s239, 64
        %s241 = scalar_lea.vmem [#allocation8], %s240
        %s242 = smul.u32 2, %s26
        %s243 = smul.u32 2, %s26
        %s244 = smul.u32 2, %s26
        %s246 = sld [smem:[#allocation6]]
        %s247 = sld [smem:[#allocation6 + $0x1]]
        %s248 = sld [smem:[#allocation6 + $0x2]]
        %s249 = sld [smem:[#allocation6 + $0x3]]
        %s250 = sld [smem:[#allocation6 + $0x4]]
        %s251 = sld [smem:[#allocation6 + $0x5]]
        %s252 = sld [smem:[#allocation6 + $0x6]]
        %s253 = sld [smem:[#allocation6 + $0x7]]
        %s254 = sld [smem:[#allocation6 + $0x8]]
        %s255 = sld [smem:[#allocation6 + $0x9]]
        %s256 = sld [smem:[#allocation6 + $0xa]]
        %s257 = sld [smem:[#allocation6 + $0xb]]
        %s258 = sld [smem:[#allocation6 + $0x1c]]
        %s259 = sld [smem:[#allocation6 + $0x1d]]
        %s260 = sld [smem:[#allocation6 + $0x1e]]
        %s261 = sld [smem:[#allocation6 + $0x1f]]
        %s262 = sld [smem:[#allocation6 + $0x20]]
        %s263 = sld [smem:[#allocation6 + $0x21]]
        %s264 = sld [smem:[#allocation6 + $0x22]]
        %s265 = sld [smem:[#allocation6 + $0x23]]
        %v266 = vld [vmem:[%s207 + $0x20] sm:$0xff]
        %v267 = vld [vmem:[%s207 + $0x28] sm:$0xff]
        %v268 = vld [vmem:[%s207 + $0x30] sm:$0xff]
        %v269 = vld [vmem:[%s207 + $0x38] sm:$0xff]
        %v270 = vld [vmem:[%s207 + $0x40] sm:$0xff]
        %v271 = vld [vmem:[%s207 + $0x48] sm:$0xff]
        %v272 = vld [vmem:[%s207 + $0x50] sm:$0xff]
        %v273 = vld [vmem:[%s207 + $0x58] sm:$0xff]
        %v274 = vld [vmem:[%s207 + $0x120] sm:$0xff]
        %v275 = vld [vmem:[%s207 + $0x128] sm:$0xff]
        %v276 = vld [vmem:[%s207 + $0x130] sm:$0xff]
        %v277 = vld [vmem:[%s207 + $0x138] sm:$0xff]
        %v278 = vld [vmem:[%s207 + $0x140] sm:$0xff]
        %v279 = vld [vmem:[%s207 + $0x148] sm:$0xff]
        %v280 = vld [vmem:[%s207 + $0x150] sm:$0xff]
        %v281 = vld [vmem:[%s207 + $0x158] sm:$0xff]
        %s282 = scalar_lea.vmem %s207, 128 [#allocation2]
        %v283 = vld [vmem:[%s282 + $0x20] sm:$0xff]
        %v284 = vld [vmem:[%s282 + $0x28] sm:$0xff]
        %v285 = vld [vmem:[%s282 + $0x30] sm:$0xff]
        %v286 = vld [vmem:[%s282 + $0x38] sm:$0xff]
        %v287 = vld [vmem:[%s282 + $0x40] sm:$0xff]
        %v288 = vld [vmem:[%s282 + $0x48] sm:$0xff]
        %v289 = vld [vmem:[%s282 + $0x50] sm:$0xff]
        %v290 = vld [vmem:[%s282 + $0x58] sm:$0xff]
        %v291 = vld [vmem:[%s282 + $0x120] sm:$0xff]
        %v292 = vld [vmem:[%s282 + $0x128] sm:$0xff]
        %v293 = vld [vmem:[%s282 + $0x130] sm:$0xff]
        %v294 = vld [vmem:[%s282 + $0x138] sm:$0xff]
        %v295 = vld [vmem:[%s282 + $0x140] sm:$0xff]
        %v296 = vld [vmem:[%s282 + $0x148] sm:$0xff]
        %v297 = vld [vmem:[%s282 + $0x150] sm:$0xff]
        %v298 = vld [vmem:[%s282 + $0x158] sm:$0xff]
        %v299 = vstv %s263
        %v300 = vmul.f32 %v299, %v266
        %v301 = vmul.f32 %v299, %v267
        %v302 = vmul.f32 %v299, %v268
        %v303 = vmul.f32 %v299, %v269
        %v304 = vmul.f32 %v299, %v270
        %v305 = vmul.f32 %v299, %v271
        %v306 = vmul.f32 %v299, %v272
        %v307 = vmul.f32 %v299, %v273
        %v308 = vmul.f32 %v299, %v274
        %v309 = vmul.f32 %v299, %v275
        %v310 = vmul.f32 %v299, %v276
        %v311 = vmul.f32 %v299, %v277
        %v312 = vmul.f32 %v299, %v278
        %v313 = vmul.f32 %v299, %v279
        %v314 = vmul.f32 %v299, %v280
        %v315 = vmul.f32 %v299, %v281
        %v316 = vstv %s264
        %v317 = vmul.f32 %v316, %v283
        %v318 = vmul.f32 %v316, %v284
        %v319 = vmul.f32 %v316, %v285
        %v320 = vmul.f32 %v316, %v286
        %v321 = vmul.f32 %v316, %v287
        %v322 = vmul.f32 %v316, %v288
        %v323 = vmul.f32 %v316, %v289
        %v324 = vmul.f32 %v316, %v290
        %v325 = vmul.f32 %v316, %v291
        %v326 = vmul.f32 %v316, %v292
        %v327 = vmul.f32 %v316, %v293
        %v328 = vmul.f32 %v316, %v294
        %v329 = vmul.f32 %v316, %v295
        %v330 = vmul.f32 %v316, %v296
        %v331 = vmul.f32 %v316, %v297
        %v332 = vmul.f32 %v316, %v298
        %v333 = vadd.f32 %v300, %v317
        %v334 = vadd.f32 %v301, %v318
        %v335 = vadd.f32 %v302, %v319
        %v336 = vadd.f32 %v303, %v320
        %v337 = vadd.f32 %v304, %v321
        %v338 = vadd.f32 %v305, %v322
        %v339 = vadd.f32 %v306, %v323
        %v340 = vadd.f32 %v307, %v324
        %v341 = vadd.f32 %v308, %v325
        %v342 = vadd.f32 %v309, %v326
        %v343 = vadd.f32 %v310, %v327
        %v344 = vadd.f32 %v311, %v328
        %v345 = vadd.f32 %v312, %v329
        %v346 = vadd.f32 %v313, %v330
        %v347 = vadd.f32 %v314, %v331
        %v348 = vadd.f32 %v315, %v332
        %v349 = vstv %s265
        %v350 = vadd.f32 %v333, %v349
        %v351 = vadd.f32 %v334, %v349
        %v352 = vadd.f32 %v335, %v349
        %v353 = vadd.f32 %v336, %v349
        %v354 = vadd.f32 %v337, %v349
        %v355 = vadd.f32 %v338, %v349
        %v356 = vadd.f32 %v339, %v349
        %v357 = vadd.f32 %v340, %v349
        %v358 = vadd.f32 %v341, %v349
        %v359 = vadd.f32 %v342, %v349
        %v360 = vadd.f32 %v343, %v349
        %v361 = vadd.f32 %v344, %v349
        %v362 = vadd.f32 %v345, %v349
        %v363 = vadd.f32 %v346, %v349
        %v364 = vadd.f32 %v347, %v349
        %v365 = vadd.f32 %v348, %v349
        %370 = vrot.lane.b32.xlu0 %v350, 96
        %v371 = vpop.permute.xlu0 %370
        %372 = vrot.lane.b32.xlu0 %v354, 96
        %v373 = vpop.permute.xlu0 %372
        %374 = vrot.lane.b32.xlu0 %v358, 96
        %v375 = vpop.permute.xlu0 %374
        %376 = vrot.lane.b32.xlu0 %v362, 96
        %v377 = vpop.permute.xlu0 %376
        %386 = vrot.lane.b32.xlu0 %v351, 32
        %v387 = vpop.permute.xlu0 %386
        %388 = vrot.lane.b32.xlu0 %v355, 32
        %v389 = vpop.permute.xlu0 %388
        %390 = vrot.lane.b32.xlu0 %v359, 32
        %v391 = vpop.permute.xlu0 %390
        %392 = vrot.lane.b32.xlu0 %v363, 32
        %v393 = vpop.permute.xlu0 %392
        %402 = vrot.lane.b32.xlu0 %v352, 96
        %v403 = vpop.permute.xlu0 %402
        %404 = vrot.lane.b32.xlu0 %v356, 96
        %v405 = vpop.permute.xlu0 %404
        %406 = vrot.lane.b32.xlu0 %v360, 96
        %v407 = vpop.permute.xlu0 %406
        %408 = vrot.lane.b32.xlu0 %v364, 96
        %v409 = vpop.permute.xlu0 %408
        %418 = vrot.lane.b32.xlu0 %v353, 32
        %v419 = vpop.permute.xlu0 %418
        %420 = vrot.lane.b32.xlu0 %v357, 32
        %v421 = vpop.permute.xlu0 %420
        %422 = vrot.lane.b32.xlu0 %v361, 32
        %v423 = vpop.permute.xlu0 %422
        %424 = vrot.lane.b32.xlu0 %v365, 32
        %v425 = vpop.permute.xlu0 %424
        %vm430 = vcmask 523264
        %v431 = vsel %vm430, %v371, %v387
        %v432 = vsel %vm430, %v373, %v389
        %v433 = vsel %vm430, %v375, %v391
        %v434 = vsel %vm430, %v377, %v393
        %v435 = vsel %vm430, %v403, %v419
        %v436 = vsel %vm430, %v405, %v421
        %v437 = vsel %vm430, %v407, %v423
        %v438 = vsel %vm430, %v409, %v425
        %439 = vst [vmem:[%s234] sm:$0xff] %v431
        %440 = vst [vmem:[%s234 + $0x8] sm:$0xff] %v435
        %441 = vst [vmem:[%s234 + $0x10] sm:$0xff] %v432
        %442 = vst [vmem:[%s234 + $0x18] sm:$0xff] %v436
        %443 = vst [vmem:[%s234 + $0x20] sm:$0xff] %v433
        %444 = vst [vmem:[%s234 + $0x28] sm:$0xff] %v437
        %445 = vst [vmem:[%s234 + $0x30] sm:$0xff] %v434
        %446 = vst [vmem:[%s234 + $0x38] sm:$0xff] %v438
        %v447 = vld [vmem:[%s207] sm:$0xff]
        %v448 = vld [vmem:[%s207 + $0x8] sm:$0xff]
        %v449 = vld [vmem:[%s207 + $0x10] sm:$0xff]
        %v450 = vld [vmem:[%s207 + $0x18] sm:$0xff]
        %v451 = vld [vmem:[%s207 + $0x100] sm:$0xff]
        %v452 = vld [vmem:[%s207 + $0x108] sm:$0xff]
        %v453 = vld [vmem:[%s207 + $0x110] sm:$0xff]
        %v454 = vld [vmem:[%s207 + $0x118] sm:$0xff]
        %v455 = vld [vmem:[%s282] sm:$0xff]
        %v456 = vld [vmem:[%s282 + $0x8] sm:$0xff]
        %v457 = vld [vmem:[%s282 + $0x10] sm:$0xff]
        %v458 = vld [vmem:[%s282 + $0x18] sm:$0xff]
        %v459 = vld [vmem:[%s282 + $0x100] sm:$0xff]
        %v460 = vld [vmem:[%s282 + $0x108] sm:$0xff]
        %v461 = vld [vmem:[%s282 + $0x110] sm:$0xff]
        %v462 = vld [vmem:[%s282 + $0x118] sm:$0xff]
        %v463 = vstv %s246
        %v464 = vmul.f32 %v463, %v447
        %v465 = vmul.f32 %v463, %v448
        %v466 = vmul.f32 %v463, %v449
        %v467 = vmul.f32 %v463, %v450
        %v468 = vmul.f32 %v463, %v451
        %v469 = vmul.f32 %v463, %v452
        %v470 = vmul.f32 %v463, %v453
        %v471 = vmul.f32 %v463, %v454
        %v472 = vstv %s247
        %v473 = vmul.f32 %v472, %v455
        %v474 = vmul.f32 %v472, %v456
        %v475 = vmul.f32 %v472, %v457
        %v476 = vmul.f32 %v472, %v458
        %v477 = vmul.f32 %v472, %v459
        %v478 = vmul.f32 %v472, %v460
        %v479 = vmul.f32 %v472, %v461
        %v480 = vmul.f32 %v472, %v462
        %v481 = vadd.f32 %v464, %v473
        %v482 = vadd.f32 %v465, %v474
        %v483 = vadd.f32 %v466, %v475
        %v484 = vadd.f32 %v467, %v476
        %v485 = vadd.f32 %v468, %v477
        %v486 = vadd.f32 %v469, %v478
        %v487 = vadd.f32 %v470, %v479
        %v488 = vadd.f32 %v471, %v480
        %v489 = vstv %s250
        %v490 = vadd.f32 %v481, %v489
        %v491 = vadd.f32 %v482, %v489
        %v492 = vadd.f32 %v483, %v489
        %v493 = vadd.f32 %v484, %v489
        %v494 = vadd.f32 %v485, %v489
        %v495 = vadd.f32 %v486, %v489
        %v496 = vadd.f32 %v487, %v489
        %v497 = vadd.f32 %v488, %v489
        %v498 = vmax.f32 %v490, %v491
        %v499 = vmax.f32 %v494, %v495
        %v500 = vmax.f32 %v492, %v493
        %v501 = vmax.f32 %v496, %v497
        %506 = vrot.lane.b32.xlu0 %v498, 127
        %v507 = vpop.permute.xlu0 %506
        %508 = vrot.lane.b32.xlu0 %v500, 127
        %v509 = vpop.permute.xlu0 %508
        %510 = vrot.lane.b32.xlu0 %v499, 127
        %v511 = vpop.permute.xlu0 %510
        %512 = vrot.lane.b32.xlu0 %v501, 127
        %v513 = vpop.permute.xlu0 %512
        %vm514 = vcmask 1039360
        %v515 = vsel %vm514, %v507, %v509
        %v516 = vsel %vm514, %v511, %v513
        %v523 = vsel %vm514, %v509, %v507
        %v524 = vsel %vm514, %v513, %v511
        %v525 = vmax.f32 %v498, %v515
        %v526 = vmax.f32 %v500, %v523
        %v527 = vmax.f32 %v499, %v516
        %v528 = vmax.f32 %v501, %v524
        %v529 = vmax.f32 %v525, 0.0
        %v530 = vmax.f32 %v526, 0.0
        %v531 = vmax.f32 %v527, 0.0
        %v532 = vmax.f32 %v528, 0.0
        %v533 = vstv %s248
        %v534 = vmul.f32 %v533, %v447
        %v535 = vmul.f32 %v533, %v448
        %v536 = vmul.f32 %v533, %v449
        %v537 = vmul.f32 %v533, %v450
        %v538 = vmul.f32 %v533, %v451
        %v539 = vmul.f32 %v533, %v452
        %v540 = vmul.f32 %v533, %v453
        %v541 = vmul.f32 %v533, %v454
        %v542 = vstv %s249
        %v543 = vmul.f32 %v542, %v455
        %v544 = vmul.f32 %v542, %v456
        %v545 = vmul.f32 %v542, %v457
        %v546 = vmul.f32 %v542, %v458
        %v547 = vmul.f32 %v542, %v459
        %v548 = vmul.f32 %v542, %v460
        %v549 = vmul.f32 %v542, %v461
        %v550 = vmul.f32 %v542, %v462
        %v551 = vadd.f32 %v534, %v543
        %v552 = vadd.f32 %v535, %v544
        %v553 = vadd.f32 %v536, %v545
        %v554 = vadd.f32 %v537, %v546
        %v555 = vadd.f32 %v538, %v547
        %v556 = vadd.f32 %v539, %v548
        %v557 = vadd.f32 %v540, %v549
        %v558 = vadd.f32 %v541, %v550
        %v559 = vstv %s251
        %v560 = vadd.f32 %v551, %v559
        %v561 = vadd.f32 %v552, %v559
        %v562 = vadd.f32 %v553, %v559
        %v563 = vadd.f32 %v554, %v559
        %v564 = vadd.f32 %v555, %v559
        %v565 = vadd.f32 %v556, %v559
        %v566 = vadd.f32 %v557, %v559
        %v567 = vadd.f32 %v558, %v559
        %v568 = vmax.f32 %v560, %v561
        %v569 = vmax.f32 %v564, %v565
        %v570 = vmax.f32 %v562, %v563
        %v571 = vmax.f32 %v566, %v567
        %576 = vrot.lane.b32.xlu0 %v568, 127
        %v577 = vpop.permute.xlu0 %576
        %578 = vrot.lane.b32.xlu0 %v570, 127
        %v579 = vpop.permute.xlu0 %578
        %580 = vrot.lane.b32.xlu0 %v569, 127
        %v581 = vpop.permute.xlu0 %580
        %582 = vrot.lane.b32.xlu0 %v571, 127
        %v583 = vpop.permute.xlu0 %582
        %v584 = vsel %vm514, %v577, %v579
        %v585 = vsel %vm514, %v581, %v583
        %v592 = vsel %vm514, %v579, %v577
        %v593 = vsel %vm514, %v583, %v581
        %v594 = vmax.f32 %v568, %v584
        %v595 = vmax.f32 %v570, %v592
        %v596 = vmax.f32 %v569, %v585
        %v597 = vmax.f32 %v571, %v593
        %v598 = vmax.f32 %v594, 0.0
        %v599 = vmax.f32 %v595, 0.0
        %v600 = vmax.f32 %v596, 0.0
        %v601 = vmax.f32 %v597, 0.0
        %v602 = vstv %s252
        %v603 = vmul.f32 %v602, %v529
        %v604 = vmul.f32 %v602, %v530
        %v605 = vmul.f32 %v602, %v531
        %v606 = vmul.f32 %v602, %v532
        %v607 = vstv %s253
        %v608 = vmul.f32 %v607, %v598
        %v609 = vmul.f32 %v607, %v599
        %v610 = vmul.f32 %v607, %v600
        %v611 = vmul.f32 %v607, %v601
        %v612 = vadd.f32 %v603, %v608
        %v613 = vadd.f32 %v604, %v609
        %v614 = vadd.f32 %v605, %v610
        %v615 = vadd.f32 %v606, %v611
        %v616 = vstv %s256
        %v617 = vadd.f32 %v612, %v616
        %v618 = vadd.f32 %v613, %v616
        %v619 = vadd.f32 %v614, %v616
        %v620 = vadd.f32 %v615, %v616
        %v621 = vmax.f32 %v617, %v618
        %v622 = vmax.f32 %v619, %v620
        %625 = vrot.lane.b32.xlu0 %v621, 126
        %v626 = vpop.permute.xlu0 %625
        %627 = vrot.lane.b32.xlu0 %v622, 126
        %v628 = vpop.permute.xlu0 %627
        %v631 = vmax.f32 %v621, %v626
        %v632 = vmax.f32 %v622, %v628
        %v633 = vmax.f32 %v631, 0.0
        %v634 = vmax.f32 %v632, 0.0
        %v635 = vstv %s254
        %v636 = vmul.f32 %v635, %v529
        %v637 = vmul.f32 %v635, %v530
        %v638 = vmul.f32 %v635, %v531
        %v639 = vmul.f32 %v635, %v532
        %v640 = vstv %s255
        %v641 = vmul.f32 %v640, %v598
        %v642 = vmul.f32 %v640, %v599
        %v643 = vmul.f32 %v640, %v600
        %v644 = vmul.f32 %v640, %v601
        %v645 = vadd.f32 %v636, %v641
        %v646 = vadd.f32 %v637, %v642
        %v647 = vadd.f32 %v638, %v643
        %v648 = vadd.f32 %v639, %v644
        %v649 = vstv %s257
        %v650 = vadd.f32 %v645, %v649
        %v651 = vadd.f32 %v646, %v649
        %v652 = vadd.f32 %v647, %v649
        %v653 = vadd.f32 %v648, %v649
        %v654 = vmax.f32 %v650, %v651
        %v655 = vmax.f32 %v652, %v653
        %658 = vrot.lane.b32.xlu0 %v654, 126
        %v659 = vpop.permute.xlu0 %658
        %660 = vrot.lane.b32.xlu0 %v655, 126
        %v661 = vpop.permute.xlu0 %660
        %v664 = vmax.f32 %v654, %v659
        %v665 = vmax.f32 %v655, %v661
        %v666 = vmax.f32 %v664, 0.0
        %v667 = vmax.f32 %v665, 0.0
        %v668 = vld [vmem:[%s207 + $0x20] sm:$0xff]
        %v669 = vld [vmem:[%s207 + $0x28] sm:$0xff]
        %v670 = vld [vmem:[%s207 + $0x30] sm:$0xff]
        %v671 = vld [vmem:[%s207 + $0x38] sm:$0xff]
        %v672 = vld [vmem:[%s207 + $0x120] sm:$0xff]
        %v673 = vld [vmem:[%s207 + $0x128] sm:$0xff]
        %v674 = vld [vmem:[%s207 + $0x130] sm:$0xff]
        %v675 = vld [vmem:[%s207 + $0x138] sm:$0xff]
        %v676 = vld [vmem:[%s282 + $0x20] sm:$0xff]
        %v677 = vld [vmem:[%s282 + $0x28] sm:$0xff]
        %v678 = vld [vmem:[%s282 + $0x30] sm:$0xff]
        %v679 = vld [vmem:[%s282 + $0x38] sm:$0xff]
        %v680 = vld [vmem:[%s282 + $0x120] sm:$0xff]
        %v681 = vld [vmem:[%s282 + $0x128] sm:$0xff]
        %v682 = vld [vmem:[%s282 + $0x130] sm:$0xff]
        %v683 = vld [vmem:[%s282 + $0x138] sm:$0xff]
        %v684 = vmul.f32 %v463, %v668
        %v685 = vmul.f32 %v463, %v669
        %v686 = vmul.f32 %v463, %v670
        %v687 = vmul.f32 %v463, %v671
        %v688 = vmul.f32 %v463, %v672
        %v689 = vmul.f32 %v463, %v673
        %v690 = vmul.f32 %v463, %v674
        %v691 = vmul.f32 %v463, %v675
        %v692 = vmul.f32 %v472, %v676
        %v693 = vmul.f32 %v472, %v677
        %v694 = vmul.f32 %v472, %v678
        %v695 = vmul.f32 %v472, %v679
        %v696 = vmul.f32 %v472, %v680
        %v697 = vmul.f32 %v472, %v681
        %v698 = vmul.f32 %v472, %v682
        %v699 = vmul.f32 %v472, %v683
        %v700 = vadd.f32 %v684, %v692
        %v701 = vadd.f32 %v685, %v693
        %v702 = vadd.f32 %v686, %v694
        %v703 = vadd.f32 %v687, %v695
        %v704 = vadd.f32 %v688, %v696
        %v705 = vadd.f32 %v689, %v697
        %v706 = vadd.f32 %v690, %v698
        %v707 = vadd.f32 %v691, %v699
        %v708 = vadd.f32 %v700, %v489
        %v709 = vadd.f32 %v701, %v489
        %v710 = vadd.f32 %v702, %v489
        %v711 = vadd.f32 %v703, %v489
        %v712 = vadd.f32 %v704, %v489
        %v713 = vadd.f32 %v705, %v489
        %v714 = vadd.f32 %v706, %v489
        %v715 = vadd.f32 %v707, %v489
        %v716 = vmax.f32 %v708, %v709
        %v717 = vmax.f32 %v712, %v713
        %v718 = vmax.f32 %v710, %v711
        %v719 = vmax.f32 %v714, %v715
        %724 = vrot.lane.b32.xlu0 %v716, 127
        %v725 = vpop.permute.xlu0 %724
        %726 = vrot.lane.b32.xlu0 %v718, 127
        %v727 = vpop.permute.xlu0 %726
        %728 = vrot.lane.b32.xlu0 %v717, 127
        %v729 = vpop.permute.xlu0 %728
        %730 = vrot.lane.b32.xlu0 %v719, 127
        %v731 = vpop.permute.xlu0 %730
        %v732 = vsel %vm514, %v725, %v727
        %v733 = vsel %vm514, %v729, %v731
        %v740 = vsel %vm514, %v727, %v725
        %v741 = vsel %vm514, %v731, %v729
        %v742 = vmax.f32 %v716, %v732
        %v743 = vmax.f32 %v718, %v740
        %v744 = vmax.f32 %v717, %v733
        %v745 = vmax.f32 %v719, %v741
        %v746 = vmax.f32 %v742, 0.0
        %v747 = vmax.f32 %v743, 0.0
        %v748 = vmax.f32 %v744, 0.0
        %v749 = vmax.f32 %v745, 0.0
        %v750 = vmul.f32 %v533, %v668
        %v751 = vmul.f32 %v533, %v669
        %v752 = vmul.f32 %v533, %v670
        %v753 = vmul.f32 %v533, %v671
        %v754 = vmul.f32 %v533, %v672
        %v755 = vmul.f32 %v533, %v673
        %v756 = vmul.f32 %v533, %v674
        %v757 = vmul.f32 %v533, %v675
        %v758 = vmul.f32 %v542, %v676
        %v759 = vmul.f32 %v542, %v677
        %v760 = vmul.f32 %v542, %v678
        %v761 = vmul.f32 %v542, %v679
        %v762 = vmul.f32 %v542, %v680
        %v763 = vmul.f32 %v542, %v681
        %v764 = vmul.f32 %v542, %v682
        %v765 = vmul.f32 %v542, %v683
        %v766 = vadd.f32 %v750, %v758
        %v767 = vadd.f32 %v751, %v759
        %v768 = vadd.f32 %v752, %v760
        %v769 = vadd.f32 %v753, %v761
        %v770 = vadd.f32 %v754, %v762
        %v771 = vadd.f32 %v755, %v763
        %v772 = vadd.f32 %v756, %v764
        %v773 = vadd.f32 %v757, %v765
        %v774 = vadd.f32 %v766, %v559
        %v775 = vadd.f32 %v767, %v559
        %v776 = vadd.f32 %v768, %v559
        %v777 = vadd.f32 %v769, %v559
        %v778 = vadd.f32 %v770, %v559
        %v779 = vadd.f32 %v771, %v559
        %v780 = vadd.f32 %v772, %v559
        %v781 = vadd.f32 %v773, %v559
        %v782 = vmax.f32 %v774, %v775
        %v783 = vmax.f32 %v778, %v779
        %v784 = vmax.f32 %v776, %v777
        %v785 = vmax.f32 %v780, %v781
        %790 = vrot.lane.b32.xlu0 %v782, 127
        %v791 = vpop.permute.xlu0 %790
        %792 = vrot.lane.b32.xlu0 %v784, 127
        %v793 = vpop.permute.xlu0 %792
        %794 = vrot.lane.b32.xlu0 %v783, 127
        %v795 = vpop.permute.xlu0 %794
        %796 = vrot.lane.b32.xlu0 %v785, 127
        %v797 = vpop.permute.xlu0 %796
        %v798 = vsel %vm514, %v791, %v793
        %v799 = vsel %vm514, %v795, %v797
        %v806 = vsel %vm514, %v793, %v791
        %v807 = vsel %vm514, %v797, %v795
        %v808 = vmax.f32 %v782, %v798
        %v809 = vmax.f32 %v784, %v806
        %v810 = vmax.f32 %v783, %v799
        %v811 = vmax.f32 %v785, %v807
        %v812 = vmax.f32 %v808, 0.0
        %v813 = vmax.f32 %v809, 0.0
        %v814 = vmax.f32 %v810, 0.0
        %v815 = vmax.f32 %v811, 0.0
        %v816 = vmul.f32 %v602, %v746
        %v817 = vmul.f32 %v602, %v747
        %v818 = vmul.f32 %v602, %v748
        %v819 = vmul.f32 %v602, %v749
        %v820 = vmul.f32 %v607, %v812
        %v821 = vmul.f32 %v607, %v813
        %v822 = vmul.f32 %v607, %v814
        %v823 = vmul.f32 %v607, %v815
        %v824 = vadd.f32 %v816, %v820
        %v825 = vadd.f32 %v817, %v821
        %v826 = vadd.f32 %v818, %v822
        %v827 = vadd.f32 %v819, %v823
        %v828 = vadd.f32 %v824, %v616
        %v829 = vadd.f32 %v825, %v616
        %v830 = vadd.f32 %v826, %v616
        %v831 = vadd.f32 %v827, %v616
        %v832 = vmax.f32 %v828, %v829
        %v833 = vmax.f32 %v830, %v831
        %836 = vrot.lane.b32.xlu0 %v832, 126
        %v837 = vpop.permute.xlu0 %836
        %838 = vrot.lane.b32.xlu0 %v833, 126
        %v839 = vpop.permute.xlu0 %838
        %v842 = vmax.f32 %v832, %v837
        %v843 = vmax.f32 %v833, %v839
        %v844 = vmax.f32 %v842, 0.0
        %v845 = vmax.f32 %v843, 0.0
        %v846 = vmul.f32 %v635, %v746
        %v847 = vmul.f32 %v635, %v747
        %v848 = vmul.f32 %v635, %v748
        %v849 = vmul.f32 %v635, %v749
        %v850 = vmul.f32 %v640, %v812
        %v851 = vmul.f32 %v640, %v813
        %v852 = vmul.f32 %v640, %v814
        %v853 = vmul.f32 %v640, %v815
        %v854 = vadd.f32 %v846, %v850
        %v855 = vadd.f32 %v847, %v851
        %v856 = vadd.f32 %v848, %v852
        %v857 = vadd.f32 %v849, %v853
        %v858 = vadd.f32 %v854, %v649
        %v859 = vadd.f32 %v855, %v649
        %v860 = vadd.f32 %v856, %v649
        %v861 = vadd.f32 %v857, %v649
        %v862 = vmax.f32 %v858, %v859
        %v863 = vmax.f32 %v860, %v861
        %866 = vrot.lane.b32.xlu0 %v862, 126
        %v867 = vpop.permute.xlu0 %866
        %868 = vrot.lane.b32.xlu0 %v863, 126
        %v869 = vpop.permute.xlu0 %868
        %v872 = vmax.f32 %v862, %v867
        %v873 = vmax.f32 %v863, %v869
        %v874 = vmax.f32 %v872, 0.0
        %v875 = vmax.f32 %v873, 0.0
        %v876 = vld [vmem:[%s207 + $0x40] sm:$0xff]
        %v877 = vld [vmem:[%s207 + $0x48] sm:$0xff]
        %v878 = vld [vmem:[%s207 + $0x50] sm:$0xff]
        %v879 = vld [vmem:[%s207 + $0x58] sm:$0xff]
        %v880 = vld [vmem:[%s207 + $0x140] sm:$0xff]
        %v881 = vld [vmem:[%s207 + $0x148] sm:$0xff]
        %v882 = vld [vmem:[%s207 + $0x150] sm:$0xff]
        %v883 = vld [vmem:[%s207 + $0x158] sm:$0xff]
        %v884 = vld [vmem:[%s282 + $0x40] sm:$0xff]
        %v885 = vld [vmem:[%s282 + $0x48] sm:$0xff]
        %v886 = vld [vmem:[%s282 + $0x50] sm:$0xff]
        %v887 = vld [vmem:[%s282 + $0x58] sm:$0xff]
        %v888 = vld [vmem:[%s282 + $0x140] sm:$0xff]
        %v889 = vld [vmem:[%s282 + $0x148] sm:$0xff]
        %v890 = vld [vmem:[%s282 + $0x150] sm:$0xff]
        %v891 = vld [vmem:[%s282 + $0x158] sm:$0xff]
        %v892 = vmul.f32 %v463, %v876
        %v893 = vmul.f32 %v463, %v877
        %v894 = vmul.f32 %v463, %v878
        %v895 = vmul.f32 %v463, %v879
        %v896 = vmul.f32 %v463, %v880
        %v897 = vmul.f32 %v463, %v881
        %v898 = vmul.f32 %v463, %v882
        %v899 = vmul.f32 %v463, %v883
        %v900 = vmul.f32 %v472, %v884
        %v901 = vmul.f32 %v472, %v885
        %v902 = vmul.f32 %v472, %v886
        %v903 = vmul.f32 %v472, %v887
        %v904 = vmul.f32 %v472, %v888
        %v905 = vmul.f32 %v472, %v889
        %v906 = vmul.f32 %v472, %v890
        %v907 = vmul.f32 %v472, %v891
        %v908 = vadd.f32 %v892, %v900
        %v909 = vadd.f32 %v893, %v901
        %v910 = vadd.f32 %v894, %v902
        %v911 = vadd.f32 %v895, %v903
        %v912 = vadd.f32 %v896, %v904
        %v913 = vadd.f32 %v897, %v905
        %v914 = vadd.f32 %v898, %v906
        %v915 = vadd.f32 %v899, %v907
        %v916 = vadd.f32 %v908, %v489
        %v917 = vadd.f32 %v909, %v489
        %v918 = vadd.f32 %v910, %v489
        %v919 = vadd.f32 %v911, %v489
        %v920 = vadd.f32 %v912, %v489
        %v921 = vadd.f32 %v913, %v489
        %v922 = vadd.f32 %v914, %v489
        %v923 = vadd.f32 %v915, %v489
        %v924 = vmax.f32 %v916, %v917
        %v925 = vmax.f32 %v920, %v921
        %v926 = vmax.f32 %v918, %v919
        %v927 = vmax.f32 %v922, %v923
        %932 = vrot.lane.b32.xlu0 %v924, 127
        %v933 = vpop.permute.xlu0 %932
        %934 = vrot.lane.b32.xlu0 %v926, 127
        %v935 = vpop.permute.xlu0 %934
        %936 = vrot.lane.b32.xlu0 %v925, 127
        %v937 = vpop.permute.xlu0 %936
        %938 = vrot.lane.b32.xlu0 %v927, 127
        %v939 = vpop.permute.xlu0 %938
        %v940 = vsel %vm514, %v933, %v935
        %v941 = vsel %vm514, %v937, %v939
        %v948 = vsel %vm514, %v935, %v933
        %v949 = vsel %vm514, %v939, %v937
        %v950 = vmax.f32 %v924, %v940
        %v951 = vmax.f32 %v926, %v948
        %v952 = vmax.f32 %v925, %v941
        %v953 = vmax.f32 %v927, %v949
        %v954 = vmax.f32 %v950, 0.0
        %v955 = vmax.f32 %v951, 0.0
        %v956 = vmax.f32 %v952, 0.0
        %v957 = vmax.f32 %v953, 0.0
        %v958 = vmul.f32 %v533, %v876
        %v959 = vmul.f32 %v533, %v877
        %v960 = vmul.f32 %v533, %v878
        %v961 = vmul.f32 %v533, %v879
        %v962 = vmul.f32 %v533, %v880
        %v963 = vmul.f32 %v533, %v881
        %v964 = vmul.f32 %v533, %v882
        %v965 = vmul.f32 %v533, %v883
        %v966 = vmul.f32 %v542, %v884
        %v967 = vmul.f32 %v542, %v885
        %v968 = vmul.f32 %v542, %v886
        %v969 = vmul.f32 %v542, %v887
        %v970 = vmul.f32 %v542, %v888
        %v971 = vmul.f32 %v542, %v889
        %v972 = vmul.f32 %v542, %v890
        %v973 = vmul.f32 %v542, %v891
        %v974 = vadd.f32 %v958, %v966
        %v975 = vadd.f32 %v959, %v967
        %v976 = vadd.f32 %v960, %v968
        %v977 = vadd.f32 %v961, %v969
        %v978 = vadd.f32 %v962, %v970
        %v979 = vadd.f32 %v963, %v971
        %v980 = vadd.f32 %v964, %v972
        %v981 = vadd.f32 %v965, %v973
        %v982 = vadd.f32 %v974, %v559
        %v983 = vadd.f32 %v975, %v559
        %v984 = vadd.f32 %v976, %v559
        %v985 = vadd.f32 %v977, %v559
        %v986 = vadd.f32 %v978, %v559
        %v987 = vadd.f32 %v979, %v559
        %v988 = vadd.f32 %v980, %v559
        %v989 = vadd.f32 %v981, %v559
        %v990 = vmax.f32 %v982, %v983
        %v991 = vmax.f32 %v986, %v987
        %v992 = vmax.f32 %v984, %v985
        %v993 = vmax.f32 %v988, %v989
        %998 = vrot.lane.b32.xlu0 %v990, 127
        %v999 = vpop.permute.xlu0 %998
        %1000 = vrot.lane.b32.xlu0 %v992, 127
        %v1001 = vpop.permute.xlu0 %1000
        %1002 = vrot.lane.b32.xlu0 %v991, 127
        %v1003 = vpop.permute.xlu0 %1002
        %1004 = vrot.lane.b32.xlu0 %v993, 127
        %v1005 = vpop.permute.xlu0 %1004
        %v1006 = vsel %vm514, %v999, %v1001
        %v1007 = vsel %vm514, %v1003, %v1005
        %v1014 = vsel %vm514, %v1001, %v999
        %v1015 = vsel %vm514, %v1005, %v1003
        %v1016 = vmax.f32 %v990, %v1006
        %v1017 = vmax.f32 %v992, %v1014
        %v1018 = vmax.f32 %v991, %v1007
        %v1019 = vmax.f32 %v993, %v1015
        %v1020 = vmax.f32 %v1016, 0.0
        %v1021 = vmax.f32 %v1017, 0.0
        %v1022 = vmax.f32 %v1018, 0.0
        %v1023 = vmax.f32 %v1019, 0.0
        %v1024 = vmul.f32 %v602, %v954
        %v1025 = vmul.f32 %v602, %v955
        %v1026 = vmul.f32 %v602, %v956
        %v1027 = vmul.f32 %v602, %v957
        %v1028 = vmul.f32 %v607, %v1020
        %v1029 = vmul.f32 %v607, %v1021
        %v1030 = vmul.f32 %v607, %v1022
        %v1031 = vmul.f32 %v607, %v1023
        %v1032 = vadd.f32 %v1024, %v1028
        %v1033 = vadd.f32 %v1025, %v1029
        %v1034 = vadd.f32 %v1026, %v1030
        %v1035 = vadd.f32 %v1027, %v1031
        %v1036 = vadd.f32 %v1032, %v616
        %v1037 = vadd.f32 %v1033, %v616
        %v1038 = vadd.f32 %v1034, %v616
        %v1039 = vadd.f32 %v1035, %v616
        %v1040 = vmax.f32 %v1036, %v1037
        %v1041 = vmax.f32 %v1038, %v1039
        %1044 = vrot.lane.b32.xlu0 %v1040, 126
        %v1045 = vpop.permute.xlu0 %1044
        %1046 = vrot.lane.b32.xlu0 %v1041, 126
        %v1047 = vpop.permute.xlu0 %1046
        %v1050 = vmax.f32 %v1040, %v1045
        %v1051 = vmax.f32 %v1041, %v1047
        %v1052 = vmax.f32 %v1050, 0.0
        %v1053 = vmax.f32 %v1051, 0.0
        %v1054 = vmul.f32 %v635, %v954
        %v1055 = vmul.f32 %v635, %v955
        %v1056 = vmul.f32 %v635, %v956
        %v1057 = vmul.f32 %v635, %v957
        %v1058 = vmul.f32 %v640, %v1020
        %v1059 = vmul.f32 %v640, %v1021
        %v1060 = vmul.f32 %v640, %v1022
        %v1061 = vmul.f32 %v640, %v1023
        %v1062 = vadd.f32 %v1054, %v1058
        %v1063 = vadd.f32 %v1055, %v1059
        %v1064 = vadd.f32 %v1056, %v1060
        %v1065 = vadd.f32 %v1057, %v1061
        %v1066 = vadd.f32 %v1062, %v649
        %v1067 = vadd.f32 %v1063, %v649
        %v1068 = vadd.f32 %v1064, %v649
        %v1069 = vadd.f32 %v1065, %v649
        %v1070 = vmax.f32 %v1066, %v1067
        %v1071 = vmax.f32 %v1068, %v1069
        %1074 = vrot.lane.b32.xlu0 %v1070, 126
        %v1075 = vpop.permute.xlu0 %1074
        %1076 = vrot.lane.b32.xlu0 %v1071, 126
        %v1077 = vpop.permute.xlu0 %1076
        %v1080 = vmax.f32 %v1070, %v1075
        %v1081 = vmax.f32 %v1071, %v1077
        %v1082 = vmax.f32 %v1080, 0.0
        %v1083 = vmax.f32 %v1081, 0.0
        %v1084 = vld [vmem:[%s207 + $0x60] sm:$0xff]
        %v1085 = vld [vmem:[%s207 + $0x68] sm:$0xff]
        %v1086 = vld [vmem:[%s207 + $0x70] sm:$0xff]
        %v1087 = vld [vmem:[%s207 + $0x78] sm:$0xff]
        %v1088 = vld [vmem:[%s207 + $0x160] sm:$0xff]
        %v1089 = vld [vmem:[%s207 + $0x168] sm:$0xff]
        %v1090 = vld [vmem:[%s207 + $0x170] sm:$0xff]
        %v1091 = vld [vmem:[%s207 + $0x178] sm:$0xff]
        %v1092 = vld [vmem:[%s282 + $0x60] sm:$0xff]
        %v1093 = vld [vmem:[%s282 + $0x68] sm:$0xff]
        %v1094 = vld [vmem:[%s282 + $0x70] sm:$0xff]
        %v1095 = vld [vmem:[%s282 + $0x78] sm:$0xff]
        %v1096 = vld [vmem:[%s282 + $0x160] sm:$0xff]
        %v1097 = vld [vmem:[%s282 + $0x168] sm:$0xff]
        %v1098 = vld [vmem:[%s282 + $0x170] sm:$0xff]
        %v1099 = vld [vmem:[%s282 + $0x178] sm:$0xff]
        %v1100 = vmul.f32 %v463, %v1084
        %v1101 = vmul.f32 %v463, %v1085
        %v1102 = vmul.f32 %v463, %v1086
        %v1103 = vmul.f32 %v463, %v1087
        %v1104 = vmul.f32 %v463, %v1088
        %v1105 = vmul.f32 %v463, %v1089
        %v1106 = vmul.f32 %v463, %v1090
        %v1107 = vmul.f32 %v463, %v1091
        %v1108 = vmul.f32 %v472, %v1092
        %v1109 = vmul.f32 %v472, %v1093
        %v1110 = vmul.f32 %v472, %v1094
        %v1111 = vmul.f32 %v472, %v1095
        %v1112 = vmul.f32 %v472, %v1096
        %v1113 = vmul.f32 %v472, %v1097
        %v1114 = vmul.f32 %v472, %v1098
        %v1115 = vmul.f32 %v472, %v1099
        %v1116 = vadd.f32 %v1100, %v1108
        %v1117 = vadd.f32 %v1101, %v1109
        %v1118 = vadd.f32 %v1102, %v1110
        %v1119 = vadd.f32 %v1103, %v1111
        %v1120 = vadd.f32 %v1104, %v1112
        %v1121 = vadd.f32 %v1105, %v1113
        %v1122 = vadd.f32 %v1106, %v1114
        %v1123 = vadd.f32 %v1107, %v1115
        %v1124 = vadd.f32 %v1116, %v489
        %v1125 = vadd.f32 %v1117, %v489
        %v1126 = vadd.f32 %v1118, %v489
        %v1127 = vadd.f32 %v1119, %v489
        %v1128 = vadd.f32 %v1120, %v489
        %v1129 = vadd.f32 %v1121, %v489
        %v1130 = vadd.f32 %v1122, %v489
        %v1131 = vadd.f32 %v1123, %v489
        %v1132 = vmax.f32 %v1124, %v1125
        %v1133 = vmax.f32 %v1128, %v1129
        %v1134 = vmax.f32 %v1126, %v1127
        %v1135 = vmax.f32 %v1130, %v1131
        %1140 = vrot.lane.b32.xlu0 %v1132, 127
        %v1141 = vpop.permute.xlu0 %1140
        %1142 = vrot.lane.b32.xlu0 %v1134, 127
        %v1143 = vpop.permute.xlu0 %1142
        %1144 = vrot.lane.b32.xlu0 %v1133, 127
        %v1145 = vpop.permute.xlu0 %1144
        %1146 = vrot.lane.b32.xlu0 %v1135, 127
        %v1147 = vpop.permute.xlu0 %1146
        %v1148 = vsel %vm514, %v1141, %v1143
        %v1149 = vsel %vm514, %v1145, %v1147
        %v1156 = vsel %vm514, %v1143, %v1141
        %v1157 = vsel %vm514, %v1147, %v1145
        %v1158 = vmax.f32 %v1132, %v1148
        %v1159 = vmax.f32 %v1134, %v1156
        %v1160 = vmax.f32 %v1133, %v1149
        %v1161 = vmax.f32 %v1135, %v1157
        %v1162 = vmax.f32 %v1158, 0.0
        %v1163 = vmax.f32 %v1159, 0.0
        %v1164 = vmax.f32 %v1160, 0.0
        %v1165 = vmax.f32 %v1161, 0.0
        %v1166 = vmul.f32 %v533, %v1084
        %v1167 = vmul.f32 %v533, %v1085
        %v1168 = vmul.f32 %v533, %v1086
        %v1169 = vmul.f32 %v533, %v1087
        %v1170 = vmul.f32 %v533, %v1088
        %v1171 = vmul.f32 %v533, %v1089
        %v1172 = vmul.f32 %v533, %v1090
        %v1173 = vmul.f32 %v533, %v1091
        %v1174 = vmul.f32 %v542, %v1092
        %v1175 = vmul.f32 %v542, %v1093
        %v1176 = vmul.f32 %v542, %v1094
        %v1177 = vmul.f32 %v542, %v1095
        %v1178 = vmul.f32 %v542, %v1096
        %v1179 = vmul.f32 %v542, %v1097
        %v1180 = vmul.f32 %v542, %v1098
        %v1181 = vmul.f32 %v542, %v1099
        %v1182 = vadd.f32 %v1166, %v1174
        %v1183 = vadd.f32 %v1167, %v1175
        %v1184 = vadd.f32 %v1168, %v1176
        %v1185 = vadd.f32 %v1169, %v1177
        %v1186 = vadd.f32 %v1170, %v1178
        %v1187 = vadd.f32 %v1171, %v1179
        %v1188 = vadd.f32 %v1172, %v1180
        %v1189 = vadd.f32 %v1173, %v1181
        %v1190 = vadd.f32 %v1182, %v559
        %v1191 = vadd.f32 %v1183, %v559
        %v1192 = vadd.f32 %v1184, %v559
        %v1193 = vadd.f32 %v1185, %v559
        %v1194 = vadd.f32 %v1186, %v559
        %v1195 = vadd.f32 %v1187, %v559
        %v1196 = vadd.f32 %v1188, %v559
        %v1197 = vadd.f32 %v1189, %v559
        %v1198 = vmax.f32 %v1190, %v1191
        %v1199 = vmax.f32 %v1194, %v1195
        %v1200 = vmax.f32 %v1192, %v1193
        %v1201 = vmax.f32 %v1196, %v1197
        %1206 = vrot.lane.b32.xlu0 %v1198, 127
        %v1207 = vpop.permute.xlu0 %1206
        %1208 = vrot.lane.b32.xlu0 %v1200, 127
        %v1209 = vpop.permute.xlu0 %1208
        %1210 = vrot.lane.b32.xlu0 %v1199, 127
        %v1211 = vpop.permute.xlu0 %1210
        %1212 = vrot.lane.b32.xlu0 %v1201, 127
        %v1213 = vpop.permute.xlu0 %1212
        %v1214 = vsel %vm514, %v1207, %v1209
        %v1215 = vsel %vm514, %v1211, %v1213
        %v1222 = vsel %vm514, %v1209, %v1207
        %v1223 = vsel %vm514, %v1213, %v1211
        %v1224 = vmax.f32 %v1198, %v1214
        %v1225 = vmax.f32 %v1200, %v1222
        %v1226 = vmax.f32 %v1199, %v1215
        %v1227 = vmax.f32 %v1201, %v1223
        %v1228 = vmax.f32 %v1224, 0.0
        %v1229 = vmax.f32 %v1225, 0.0
        %v1230 = vmax.f32 %v1226, 0.0
        %v1231 = vmax.f32 %v1227, 0.0
        %v1232 = vmul.f32 %v602, %v1162
        %v1233 = vmul.f32 %v602, %v1163
        %v1234 = vmul.f32 %v602, %v1164
        %v1235 = vmul.f32 %v602, %v1165
        %v1236 = vmul.f32 %v607, %v1228
        %v1237 = vmul.f32 %v607, %v1229
        %v1238 = vmul.f32 %v607, %v1230
        %v1239 = vmul.f32 %v607, %v1231
        %v1240 = vadd.f32 %v1232, %v1236
        %v1241 = vadd.f32 %v1233, %v1237
        %v1242 = vadd.f32 %v1234, %v1238
        %v1243 = vadd.f32 %v1235, %v1239
        %v1244 = vadd.f32 %v1240, %v616
        %v1245 = vadd.f32 %v1241, %v616
        %v1246 = vadd.f32 %v1242, %v616
        %v1247 = vadd.f32 %v1243, %v616
        %v1248 = vmax.f32 %v1244, %v1245
        %v1249 = vmax.f32 %v1246, %v1247
        %1252 = vrot.lane.b32.xlu0 %v1248, 126
        %v1253 = vpop.permute.xlu0 %1252
        %1254 = vrot.lane.b32.xlu0 %v1249, 126
        %v1255 = vpop.permute.xlu0 %1254
        %v1258 = vmax.f32 %v1248, %v1253
        %v1259 = vmax.f32 %v1249, %v1255
        %v1260 = vmax.f32 %v1258, 0.0
        %v1261 = vmax.f32 %v1259, 0.0
        %v1262 = vmul.f32 %v635, %v1162
        %v1263 = vmul.f32 %v635, %v1163
        %v1264 = vmul.f32 %v635, %v1164
        %v1265 = vmul.f32 %v635, %v1165
        %v1266 = vmul.f32 %v640, %v1228
        %v1267 = vmul.f32 %v640, %v1229
        %v1268 = vmul.f32 %v640, %v1230
        %v1269 = vmul.f32 %v640, %v1231
        %v1270 = vadd.f32 %v1262, %v1266
        %v1271 = vadd.f32 %v1263, %v1267
        %v1272 = vadd.f32 %v1264, %v1268
        %v1273 = vadd.f32 %v1265, %v1269
        %v1274 = vadd.f32 %v1270, %v649
        %v1275 = vadd.f32 %v1271, %v649
        %v1276 = vadd.f32 %v1272, %v649
        %v1277 = vadd.f32 %v1273, %v649
        %v1278 = vmax.f32 %v1274, %v1275
        %v1279 = vmax.f32 %v1276, %v1277
        %1282 = vrot.lane.b32.xlu0 %v1278, 126
        %v1283 = vpop.permute.xlu0 %1282
        %1284 = vrot.lane.b32.xlu0 %v1279, 126
        %v1285 = vpop.permute.xlu0 %1284
        %v1288 = vmax.f32 %v1278, %v1283
        %v1289 = vmax.f32 %v1279, %v1285
        %v1290 = vmax.f32 %v1288, 0.0
        %v1291 = vmax.f32 %v1289, 0.0
        %s1292 = sld [smem:[#allocation6 + $0xc]]
        %v1293 = vstv %s1292
        %v1294 = vmul.f32 %v1293, %v633
        %v1295 = vmul.f32 %v1293, %v844
        %v1296 = vmul.f32 %v1293, %v1052
        %v1297 = vmul.f32 %v1293, %v1260
        %v1298 = vmul.f32 %v1293, %v634
        %v1299 = vmul.f32 %v1293, %v845
        %v1300 = vmul.f32 %v1293, %v1053
        %v1301 = vmul.f32 %v1293, %v1261
        %s1302 = sld [smem:[#allocation6 + $0x14]]
        %v1303 = vstv %s1302
        %v1304 = vmul.f32 %v1303, %v666
        %v1305 = vmul.f32 %v1303, %v874
        %v1306 = vmul.f32 %v1303, %v1082
        %v1307 = vmul.f32 %v1303, %v1290
        %v1308 = vmul.f32 %v1303, %v667
        %v1309 = vmul.f32 %v1303, %v875
        %v1310 = vmul.f32 %v1303, %v1083
        %v1311 = vmul.f32 %v1303, %v1291
        %v1312 = vadd.f32 %v1294, %v1304
        %v1313 = vadd.f32 %v1295, %v1305
        %v1314 = vadd.f32 %v1296, %v1306
        %v1315 = vadd.f32 %v1297, %v1307
        %v1316 = vadd.f32 %v1298, %v1308
        %v1317 = vadd.f32 %v1299, %v1309
        %v1318 = vadd.f32 %v1300, %v1310
        %v1319 = vadd.f32 %v1301, %v1311
        %v1320 = vstv %s258
        %v1321 = vadd.f32 %v1312, %v1320
        %v1322 = vadd.f32 %v1313, %v1320
        %v1323 = vadd.f32 %v1314, %v1320
        %v1324 = vadd.f32 %v1315, %v1320
        %v1325 = vadd.f32 %v1316, %v1320
        %v1326 = vadd.f32 %v1317, %v1320
        %v1327 = vadd.f32 %v1318, %v1320
        %v1328 = vadd.f32 %v1319, %v1320
        %v1329 = vmax.f32 %v1321, 0.0
        %v1330 = vmax.f32 %v1322, 0.0
        %v1331 = vmax.f32 %v1323, 0.0
        %v1332 = vmax.f32 %v1324, 0.0
        %v1333 = vmax.f32 %v1325, 0.0
        %v1334 = vmax.f32 %v1326, 0.0
        %v1335 = vmax.f32 %v1327, 0.0
        %v1336 = vmax.f32 %v1328, 0.0
        %s1337 = sld [smem:[#allocation6 + $0x10]]
        %v1338 = vstv %s1337
        %v1339 = vmul.f32 %v1338, %v633
        %v1340 = vmul.f32 %v1338, %v844
        %v1341 = vmul.f32 %v1338, %v1052
        %v1342 = vmul.f32 %v1338, %v1260
        %v1343 = vmul.f32 %v1338, %v634
        %v1344 = vmul.f32 %v1338, %v845
        %v1345 = vmul.f32 %v1338, %v1053
        %v1346 = vmul.f32 %v1338, %v1261
        %s1347 = sld [smem:[#allocation6 + $0x18]]
        %v1348 = vstv %s1347
        %v1349 = vmul.f32 %v1348, %v666
        %v1350 = vmul.f32 %v1348, %v874
        %v1351 = vmul.f32 %v1348, %v1082
        %v1352 = vmul.f32 %v1348, %v1290
        %v1353 = vmul.f32 %v1348, %v667
        %v1354 = vmul.f32 %v1348, %v875
        %v1355 = vmul.f32 %v1348, %v1083
        %v1356 = vmul.f32 %v1348, %v1291
        %v1357 = vadd.f32 %v1339, %v1349
        %v1358 = vadd.f32 %v1340, %v1350
        %v1359 = vadd.f32 %v1341, %v1351
        %v1360 = vadd.f32 %v1342, %v1352
        %v1361 = vadd.f32 %v1343, %v1353
        %v1362 = vadd.f32 %v1344, %v1354
        %v1363 = vadd.f32 %v1345, %v1355
        %v1364 = vadd.f32 %v1346, %v1356
        %v1365 = vstv %s259
        %v1366 = vadd.f32 %v1357, %v1365
        %v1367 = vadd.f32 %v1358, %v1365
        %v1368 = vadd.f32 %v1359, %v1365
        %v1369 = vadd.f32 %v1360, %v1365
        %v1370 = vadd.f32 %v1361, %v1365
        %v1371 = vadd.f32 %v1362, %v1365
        %v1372 = vadd.f32 %v1363, %v1365
        %v1373 = vadd.f32 %v1364, %v1365
        %v1374 = vmax.f32 %v1366, 0.0
        %v1375 = vmax.f32 %v1367, 0.0
        %v1376 = vmax.f32 %v1368, 0.0
        %v1377 = vmax.f32 %v1369, 0.0
        %v1378 = vmax.f32 %v1370, 0.0
        %v1379 = vmax.f32 %v1371, 0.0
        %v1380 = vmax.f32 %v1372, 0.0
        %v1381 = vmax.f32 %v1373, 0.0
        %v1382 = vstv %s260
        %v1383 = vmul.f32 %v1382, %v1329
        %v1384 = vmul.f32 %v1382, %v1330
        %v1385 = vmul.f32 %v1382, %v1331
        %v1386 = vmul.f32 %v1382, %v1332
        %v1387 = vmul.f32 %v1382, %v1333
        %v1388 = vmul.f32 %v1382, %v1334
        %v1389 = vmul.f32 %v1382, %v1335
        %v1390 = vmul.f32 %v1382, %v1336
        %v1391 = vstv %s261
        %v1392 = vmul.f32 %v1391, %v1374
        %v1393 = vmul.f32 %v1391, %v1375
        %v1394 = vmul.f32 %v1391, %v1376
        %v1395 = vmul.f32 %v1391, %v1377
        %v1396 = vmul.f32 %v1391, %v1378
        %v1397 = vmul.f32 %v1391, %v1379
        %v1398 = vmul.f32 %v1391, %v1380
        %v1399 = vmul.f32 %v1391, %v1381
        %v1400 = vadd.f32 %v1383, %v1392
        %v1401 = vadd.f32 %v1384, %v1393
        %v1402 = vadd.f32 %v1385, %v1394
        %v1403 = vadd.f32 %v1386, %v1395
        %v1404 = vadd.f32 %v1387, %v1396
        %v1405 = vadd.f32 %v1388, %v1397
        %v1406 = vadd.f32 %v1389, %v1398
        %v1407 = vadd.f32 %v1390, %v1399
        %s1408 = sld [smem:[#allocation6 + $0xd]]
        %v1409 = vstv %s1408
        %v1410 = vmul.f32 %v1409, %v633
        %v1411 = vmul.f32 %v1409, %v844
        %v1412 = vmul.f32 %v1409, %v1052
        %v1413 = vmul.f32 %v1409, %v1260
        %v1414 = vmul.f32 %v1409, %v634
        %v1415 = vmul.f32 %v1409, %v845
        %v1416 = vmul.f32 %v1409, %v1053
        %v1417 = vmul.f32 %v1409, %v1261
        %s1418 = sld [smem:[#allocation6 + $0x15]]
        %v1419 = vstv %s1418
        %v1420 = vmul.f32 %v1419, %v666
        %v1421 = vmul.f32 %v1419, %v874
        %v1422 = vmul.f32 %v1419, %v1082
        %v1423 = vmul.f32 %v1419, %v1290
        %v1424 = vmul.f32 %v1419, %v667
        %v1425 = vmul.f32 %v1419, %v875
        %v1426 = vmul.f32 %v1419, %v1083
        %v1427 = vmul.f32 %v1419, %v1291
        %v1428 = vadd.f32 %v1410, %v1420
        %v1429 = vadd.f32 %v1411, %v1421
        %v1430 = vadd.f32 %v1412, %v1422
        %v1431 = vadd.f32 %v1413, %v1423
        %v1432 = vadd.f32 %v1414, %v1424
        %v1433 = vadd.f32 %v1415, %v1425
        %v1434 = vadd.f32 %v1416, %v1426
        %v1435 = vadd.f32 %v1417, %v1427
        %v1436 = vadd.f32 %v1428, %v1320
        %v1437 = vadd.f32 %v1429, %v1320
        %v1438 = vadd.f32 %v1430, %v1320
        %v1439 = vadd.f32 %v1431, %v1320
        %v1440 = vadd.f32 %v1432, %v1320
        %v1441 = vadd.f32 %v1433, %v1320
        %v1442 = vadd.f32 %v1434, %v1320
        %v1443 = vadd.f32 %v1435, %v1320
        %v1444 = vmax.f32 %v1436, 0.0
        %v1445 = vmax.f32 %v1437, 0.0
        %v1446 = vmax.f32 %v1438, 0.0
        %v1447 = vmax.f32 %v1439, 0.0
        %v1448 = vmax.f32 %v1440, 0.0
        %v1449 = vmax.f32 %v1441, 0.0
        %v1450 = vmax.f32 %v1442, 0.0
        %v1451 = vmax.f32 %v1443, 0.0
        %s1452 = sld [smem:[#allocation6 + $0x11]]
        %v1453 = vstv %s1452
        %v1454 = vmul.f32 %v1453, %v633
        %v1455 = vmul.f32 %v1453, %v844
        %v1456 = vmul.f32 %v1453, %v1052
        %v1457 = vmul.f32 %v1453, %v1260
        %v1458 = vmul.f32 %v1453, %v634
        %v1459 = vmul.f32 %v1453, %v845
        %v1460 = vmul.f32 %v1453, %v1053
        %v1461 = vmul.f32 %v1453, %v1261
        %s1462 = sld [smem:[#allocation6 + $0x19]]
        %v1463 = vstv %s1462
        %v1464 = vmul.f32 %v1463, %v666
        %v1465 = vmul.f32 %v1463, %v874
        %v1466 = vmul.f32 %v1463, %v1082
        %v1467 = vmul.f32 %v1463, %v1290
        %v1468 = vmul.f32 %v1463, %v667
        %v1469 = vmul.f32 %v1463, %v875
        %v1470 = vmul.f32 %v1463, %v1083
        %v1471 = vmul.f32 %v1463, %v1291
        %v1472 = vadd.f32 %v1454, %v1464
        %v1473 = vadd.f32 %v1455, %v1465
        %v1474 = vadd.f32 %v1456, %v1466
        %v1475 = vadd.f32 %v1457, %v1467
        %v1476 = vadd.f32 %v1458, %v1468
        %v1477 = vadd.f32 %v1459, %v1469
        %v1478 = vadd.f32 %v1460, %v1470
        %v1479 = vadd.f32 %v1461, %v1471
        %v1480 = vadd.f32 %v1472, %v1365
        %v1481 = vadd.f32 %v1473, %v1365
        %v1482 = vadd.f32 %v1474, %v1365
        %v1483 = vadd.f32 %v1475, %v1365
        %v1484 = vadd.f32 %v1476, %v1365
        %v1485 = vadd.f32 %v1477, %v1365
        %v1486 = vadd.f32 %v1478, %v1365
        %v1487 = vadd.f32 %v1479, %v1365
        %v1488 = vmax.f32 %v1480, 0.0
        %v1489 = vmax.f32 %v1481, 0.0
        %v1490 = vmax.f32 %v1482, 0.0
        %v1491 = vmax.f32 %v1483, 0.0
        %v1492 = vmax.f32 %v1484, 0.0
        %v1493 = vmax.f32 %v1485, 0.0
        %v1494 = vmax.f32 %v1486, 0.0
        %v1495 = vmax.f32 %v1487, 0.0
        %v1496 = vmul.f32 %v1382, %v1444
        %v1497 = vmul.f32 %v1382, %v1445
        %v1498 = vmul.f32 %v1382, %v1446
        %v1499 = vmul.f32 %v1382, %v1447
        %v1500 = vmul.f32 %v1382, %v1448
        %v1501 = vmul.f32 %v1382, %v1449
        %v1502 = vmul.f32 %v1382, %v1450
        %v1503 = vmul.f32 %v1382, %v1451
        %v1504 = vmul.f32 %v1391, %v1488
        %v1505 = vmul.f32 %v1391, %v1489
        %v1506 = vmul.f32 %v1391, %v1490
        %v1507 = vmul.f32 %v1391, %v1491
        %v1508 = vmul.f32 %v1391, %v1492
        %v1509 = vmul.f32 %v1391, %v1493
        %v1510 = vmul.f32 %v1391, %v1494
        %v1511 = vmul.f32 %v1391, %v1495
        %v1512 = vadd.f32 %v1496, %v1504
        %v1513 = vadd.f32 %v1497, %v1505
        %v1514 = vadd.f32 %v1498, %v1506
        %v1515 = vadd.f32 %v1499, %v1507
        %v1516 = vadd.f32 %v1500, %v1508
        %v1517 = vadd.f32 %v1501, %v1509
        %v1518 = vadd.f32 %v1502, %v1510
        %v1519 = vadd.f32 %v1503, %v1511
        %s1520 = sld [smem:[#allocation6 + $0xe]]
        %v1521 = vstv %s1520
        %v1522 = vmul.f32 %v1521, %v633
        %v1523 = vmul.f32 %v1521, %v844
        %v1524 = vmul.f32 %v1521, %v1052
        %v1525 = vmul.f32 %v1521, %v1260
        %v1526 = vmul.f32 %v1521, %v634
        %v1527 = vmul.f32 %v1521, %v845
        %v1528 = vmul.f32 %v1521, %v1053
        %v1529 = vmul.f32 %v1521, %v1261
        %s1530 = sld [smem:[#allocation6 + $0x16]]
        %v1531 = vstv %s1530
        %v1532 = vmul.f32 %v1531, %v666
        %v1533 = vmul.f32 %v1531, %v874
        %v1534 = vmul.f32 %v1531, %v1082
        %v1535 = vmul.f32 %v1531, %v1290
        %v1536 = vmul.f32 %v1531, %v667
        %v1537 = vmul.f32 %v1531, %v875
        %v1538 = vmul.f32 %v1531, %v1083
        %v1539 = vmul.f32 %v1531, %v1291
        %v1540 = vadd.f32 %v1522, %v1532
        %v1541 = vadd.f32 %v1523, %v1533
        %v1542 = vadd.f32 %v1524, %v1534
        %v1543 = vadd.f32 %v1525, %v1535
        %v1544 = vadd.f32 %v1526, %v1536
        %v1545 = vadd.f32 %v1527, %v1537
        %v1546 = vadd.f32 %v1528, %v1538
        %v1547 = vadd.f32 %v1529, %v1539
        %v1548 = vadd.f32 %v1540, %v1320
        %v1549 = vadd.f32 %v1541, %v1320
        %v1550 = vadd.f32 %v1542, %v1320
        %v1551 = vadd.f32 %v1543, %v1320
        %v1552 = vadd.f32 %v1544, %v1320
        %v1553 = vadd.f32 %v1545, %v1320
        %v1554 = vadd.f32 %v1546, %v1320
        %v1555 = vadd.f32 %v1547, %v1320
        %v1556 = vmax.f32 %v1548, 0.0
        %v1557 = vmax.f32 %v1549, 0.0
        %v1558 = vmax.f32 %v1550, 0.0
        %v1559 = vmax.f32 %v1551, 0.0
        %v1560 = vmax.f32 %v1552, 0.0
        %v1561 = vmax.f32 %v1553, 0.0
        %v1562 = vmax.f32 %v1554, 0.0
        %v1563 = vmax.f32 %v1555, 0.0
        %s1564 = sld [smem:[#allocation6 + $0x12]]
        %v1565 = vstv %s1564
        %v1566 = vmul.f32 %v1565, %v633
        %v1567 = vmul.f32 %v1565, %v844
        %v1568 = vmul.f32 %v1565, %v1052
        %v1569 = vmul.f32 %v1565, %v1260
        %v1570 = vmul.f32 %v1565, %v634
        %v1571 = vmul.f32 %v1565, %v845
        %v1572 = vmul.f32 %v1565, %v1053
        %v1573 = vmul.f32 %v1565, %v1261
        %s1574 = sld [smem:[#allocation6 + $0x1a]]
        %v1575 = vstv %s1574
        %v1576 = vmul.f32 %v1575, %v666
        %v1577 = vmul.f32 %v1575, %v874
        %v1578 = vmul.f32 %v1575, %v1082
        %v1579 = vmul.f32 %v1575, %v1290
        %v1580 = vmul.f32 %v1575, %v667
        %v1581 = vmul.f32 %v1575, %v875
        %v1582 = vmul.f32 %v1575, %v1083
        %v1583 = vmul.f32 %v1575, %v1291
        %v1584 = vadd.f32 %v1566, %v1576
        %v1585 = vadd.f32 %v1567, %v1577
        %v1586 = vadd.f32 %v1568, %v1578
        %v1587 = vadd.f32 %v1569, %v1579
        %v1588 = vadd.f32 %v1570, %v1580
        %v1589 = vadd.f32 %v1571, %v1581
        %v1590 = vadd.f32 %v1572, %v1582
        %v1591 = vadd.f32 %v1573, %v1583
        %v1592 = vadd.f32 %v1584, %v1365
        %v1593 = vadd.f32 %v1585, %v1365
        %v1594 = vadd.f32 %v1586, %v1365
        %v1595 = vadd.f32 %v1587, %v1365
        %v1596 = vadd.f32 %v1588, %v1365
        %v1597 = vadd.f32 %v1589, %v1365
        %v1598 = vadd.f32 %v1590, %v1365
        %v1599 = vadd.f32 %v1591, %v1365
        %v1600 = vmax.f32 %v1592, 0.0
        %v1601 = vmax.f32 %v1593, 0.0
        %v1602 = vmax.f32 %v1594, 0.0
        %v1603 = vmax.f32 %v1595, 0.0
        %v1604 = vmax.f32 %v1596, 0.0
        %v1605 = vmax.f32 %v1597, 0.0
        %v1606 = vmax.f32 %v1598, 0.0
        %v1607 = vmax.f32 %v1599, 0.0
        %v1608 = vmul.f32 %v1382, %v1556
        %v1609 = vmul.f32 %v1382, %v1557
        %v1610 = vmul.f32 %v1382, %v1558
        %v1611 = vmul.f32 %v1382, %v1559
        %v1612 = vmul.f32 %v1382, %v1560
        %v1613 = vmul.f32 %v1382, %v1561
        %v1614 = vmul.f32 %v1382, %v1562
        %v1615 = vmul.f32 %v1382, %v1563
        %v1616 = vmul.f32 %v1391, %v1600
        %v1617 = vmul.f32 %v1391, %v1601
        %v1618 = vmul.f32 %v1391, %v1602
        %v1619 = vmul.f32 %v1391, %v1603
        %v1620 = vmul.f32 %v1391, %v1604
        %v1621 = vmul.f32 %v1391, %v1605
        %v1622 = vmul.f32 %v1391, %v1606
        %v1623 = vmul.f32 %v1391, %v1607
        %v1624 = vadd.f32 %v1608, %v1616
        %v1625 = vadd.f32 %v1609, %v1617
        %v1626 = vadd.f32 %v1610, %v1618
        %v1627 = vadd.f32 %v1611, %v1619
        %v1628 = vadd.f32 %v1612, %v1620
        %v1629 = vadd.f32 %v1613, %v1621
        %v1630 = vadd.f32 %v1614, %v1622
        %v1631 = vadd.f32 %v1615, %v1623
        %s1632 = sld [smem:[#allocation6 + $0xf]]
        %v1633 = vstv %s1632
        %v1634 = vmul.f32 %v1633, %v633
        %v1635 = vmul.f32 %v1633, %v844
        %v1636 = vmul.f32 %v1633, %v1052
        %v1637 = vmul.f32 %v1633, %v1260
        %v1638 = vmul.f32 %v1633, %v634
        %v1639 = vmul.f32 %v1633, %v845
        %v1640 = vmul.f32 %v1633, %v1053
        %v1641 = vmul.f32 %v1633, %v1261
        %s1642 = sld [smem:[#allocation6 + $0x17]]
        %v1643 = vstv %s1642
        %v1644 = vmul.f32 %v1643, %v666
        %v1645 = vmul.f32 %v1643, %v874
        %v1646 = vmul.f32 %v1643, %v1082
        %v1647 = vmul.f32 %v1643, %v1290
        %v1648 = vmul.f32 %v1643, %v667
        %v1649 = vmul.f32 %v1643, %v875
        %v1650 = vmul.f32 %v1643, %v1083
        %v1651 = vmul.f32 %v1643, %v1291
        %v1652 = vadd.f32 %v1634, %v1644
        %v1653 = vadd.f32 %v1635, %v1645
        %v1654 = vadd.f32 %v1636, %v1646
        %v1655 = vadd.f32 %v1637, %v1647
        %v1656 = vadd.f32 %v1638, %v1648
        %v1657 = vadd.f32 %v1639, %v1649
        %v1658 = vadd.f32 %v1640, %v1650
        %v1659 = vadd.f32 %v1641, %v1651
        %v1660 = vadd.f32 %v1652, %v1320
        %v1661 = vadd.f32 %v1653, %v1320
        %v1662 = vadd.f32 %v1654, %v1320
        %v1663 = vadd.f32 %v1655, %v1320
        %v1664 = vadd.f32 %v1656, %v1320
        %v1665 = vadd.f32 %v1657, %v1320
        %v1666 = vadd.f32 %v1658, %v1320
        %v1667 = vadd.f32 %v1659, %v1320
        %v1668 = vmax.f32 %v1660, 0.0
        %v1669 = vmax.f32 %v1661, 0.0
        %v1670 = vmax.f32 %v1662, 0.0
        %v1671 = vmax.f32 %v1663, 0.0
        %v1672 = vmax.f32 %v1664, 0.0
        %v1673 = vmax.f32 %v1665, 0.0
        %v1674 = vmax.f32 %v1666, 0.0
        %v1675 = vmax.f32 %v1667, 0.0
        %s1676 = sld [smem:[#allocation6 + $0x13]]
        %v1677 = vstv %s1676
        %v1678 = vmul.f32 %v1677, %v633
        %v1679 = vmul.f32 %v1677, %v844
        %v1680 = vmul.f32 %v1677, %v1052
        %v1681 = vmul.f32 %v1677, %v1260
        %v1682 = vmul.f32 %v1677, %v634
        %v1683 = vmul.f32 %v1677, %v845
        %v1684 = vmul.f32 %v1677, %v1053
        %v1685 = vmul.f32 %v1677, %v1261
        %s1686 = sld [smem:[#allocation6 + $0x1b]]
        %v1687 = vstv %s1686
        %v1688 = vmul.f32 %v1687, %v666
        %v1689 = vmul.f32 %v1687, %v874
        %v1690 = vmul.f32 %v1687, %v1082
        %v1691 = vmul.f32 %v1687, %v1290
        %v1692 = vmul.f32 %v1687, %v667
        %v1693 = vmul.f32 %v1687, %v875
        %v1694 = vmul.f32 %v1687, %v1083
        %v1695 = vmul.f32 %v1687, %v1291
        %v1696 = vadd.f32 %v1678, %v1688
        %v1697 = vadd.f32 %v1679, %v1689
        %v1698 = vadd.f32 %v1680, %v1690
        %v1699 = vadd.f32 %v1681, %v1691
        %v1700 = vadd.f32 %v1682, %v1692
        %v1701 = vadd.f32 %v1683, %v1693
        %v1702 = vadd.f32 %v1684, %v1694
        %v1703 = vadd.f32 %v1685, %v1695
        %v1704 = vadd.f32 %v1696, %v1365
        %v1705 = vadd.f32 %v1697, %v1365
        %v1706 = vadd.f32 %v1698, %v1365
        %v1707 = vadd.f32 %v1699, %v1365
        %v1708 = vadd.f32 %v1700, %v1365
        %v1709 = vadd.f32 %v1701, %v1365
        %v1710 = vadd.f32 %v1702, %v1365
        %v1711 = vadd.f32 %v1703, %v1365
        %v1712 = vmax.f32 %v1704, 0.0
        %v1713 = vmax.f32 %v1705, 0.0
        %v1714 = vmax.f32 %v1706, 0.0
        %v1715 = vmax.f32 %v1707, 0.0
        %v1716 = vmax.f32 %v1708, 0.0
        %v1717 = vmax.f32 %v1709, 0.0
        %v1718 = vmax.f32 %v1710, 0.0
        %v1719 = vmax.f32 %v1711, 0.0
        %v1720 = vmul.f32 %v1382, %v1668
        %v1721 = vmul.f32 %v1382, %v1669
        %v1722 = vmul.f32 %v1382, %v1670
        %v1723 = vmul.f32 %v1382, %v1671
        %v1724 = vmul.f32 %v1382, %v1672
        %v1725 = vmul.f32 %v1382, %v1673
        %v1726 = vmul.f32 %v1382, %v1674
        %v1727 = vmul.f32 %v1382, %v1675
        %v1728 = vmul.f32 %v1391, %v1712
        %v1729 = vmul.f32 %v1391, %v1713
        %v1730 = vmul.f32 %v1391, %v1714
        %v1731 = vmul.f32 %v1391, %v1715
        %v1732 = vmul.f32 %v1391, %v1716
        %v1733 = vmul.f32 %v1391, %v1717
        %v1734 = vmul.f32 %v1391, %v1718
        %v1735 = vmul.f32 %v1391, %v1719
        %v1736 = vadd.f32 %v1720, %v1728
        %v1737 = vadd.f32 %v1721, %v1729
        %v1738 = vadd.f32 %v1722, %v1730
        %v1739 = vadd.f32 %v1723, %v1731
        %v1740 = vadd.f32 %v1724, %v1732
        %v1741 = vadd.f32 %v1725, %v1733
        %v1742 = vadd.f32 %v1726, %v1734
        %v1743 = vadd.f32 %v1727, %v1735
        %v1744 = vpack.c.bf16 %v1401, %v1400
        %v1745 = vpack.c.bf16 %v1513, %v1512
        %v1746 = vpack.c.bf16 %v1403, %v1402
        %v1747 = vpack.c.bf16 %v1515, %v1514
        %v1748 = vpack.c.bf16 %v1625, %v1624
        %v1749 = vpack.c.bf16 %v1737, %v1736
        %v1750 = vpack.c.bf16 %v1627, %v1626
        %v1751 = vpack.c.bf16 %v1739, %v1738
        %v1752 = vpack.c.bf16 %v1405, %v1404
        %v1753 = vpack.c.bf16 %v1517, %v1516
        %v1754 = vpack.c.bf16 %v1407, %v1406
        %v1755 = vpack.c.bf16 %v1519, %v1518
        %v1756 = vpack.c.bf16 %v1629, %v1628
        %v1757 = vpack.c.bf16 %v1741, %v1740
        %v1758 = vpack.c.bf16 %v1631, %v1630
        %v1759 = vpack.c.bf16 %v1743, %v1742
        %v1760 = vunpack.c.l.bf16 %v1744
        %v1761 = vunpack.c.l.bf16 %v1745
        %v1762 = vunpack.c.h.bf16 %v1744
        %v1763 = vunpack.c.h.bf16 %v1745
        %v1764 = vunpack.c.l.bf16 %v1746
        %v1765 = vunpack.c.l.bf16 %v1747
        %v1766 = vunpack.c.h.bf16 %v1746
        %v1767 = vunpack.c.h.bf16 %v1747
        %v1768 = vunpack.c.l.bf16 %v1748
        %v1769 = vunpack.c.l.bf16 %v1749
        %v1770 = vunpack.c.h.bf16 %v1748
        %v1771 = vunpack.c.h.bf16 %v1749
        %v1772 = vunpack.c.l.bf16 %v1750
        %v1773 = vunpack.c.l.bf16 %v1751
        %v1774 = vunpack.c.h.bf16 %v1750
        %v1775 = vunpack.c.h.bf16 %v1751
        %v1776 = vunpack.c.l.bf16 %v1752
        %v1777 = vunpack.c.l.bf16 %v1753
        %v1778 = vunpack.c.h.bf16 %v1752
        %v1779 = vunpack.c.h.bf16 %v1753
        %v1780 = vunpack.c.l.bf16 %v1754
        %v1781 = vunpack.c.l.bf16 %v1755
        %v1782 = vunpack.c.h.bf16 %v1754
        %v1783 = vunpack.c.h.bf16 %v1755
        %v1784 = vunpack.c.l.bf16 %v1756
        %v1785 = vunpack.c.l.bf16 %v1757
        %v1786 = vunpack.c.h.bf16 %v1756
        %v1787 = vunpack.c.h.bf16 %v1757
        %v1788 = vunpack.c.l.bf16 %v1758
        %v1789 = vunpack.c.l.bf16 %v1759
        %v1790 = vunpack.c.h.bf16 %v1758
        %v1791 = vunpack.c.h.bf16 %v1759
        %v1792 = vsub.f32 %v1400, %v1760
        %v1793 = vsub.f32 %v1512, %v1761
        %v1794 = vsub.f32 %v1401, %v1762
        %v1795 = vsub.f32 %v1513, %v1763
        %v1796 = vsub.f32 %v1402, %v1764
        %v1797 = vsub.f32 %v1514, %v1765
        %v1798 = vsub.f32 %v1403, %v1766
        %v1799 = vsub.f32 %v1515, %v1767
        %v1800 = vsub.f32 %v1624, %v1768
        %v1801 = vsub.f32 %v1736, %v1769
        %v1802 = vsub.f32 %v1625, %v1770
        %v1803 = vsub.f32 %v1737, %v1771
        %v1804 = vsub.f32 %v1626, %v1772
        %v1805 = vsub.f32 %v1738, %v1773
        %v1806 = vsub.f32 %v1627, %v1774
        %v1807 = vsub.f32 %v1739, %v1775
        %v1808 = vsub.f32 %v1404, %v1776
        %v1809 = vsub.f32 %v1516, %v1777
        %v1810 = vsub.f32 %v1405, %v1778
        %v1811 = vsub.f32 %v1517, %v1779
        %v1812 = vsub.f32 %v1406, %v1780
        %v1813 = vsub.f32 %v1518, %v1781
        %v1814 = vsub.f32 %v1407, %v1782
        %v1815 = vsub.f32 %v1519, %v1783
        %v1816 = vsub.f32 %v1628, %v1784
        %v1817 = vsub.f32 %v1740, %v1785
        %v1818 = vsub.f32 %v1629, %v1786
        %v1819 = vsub.f32 %v1741, %v1787
        %v1820 = vsub.f32 %v1630, %v1788
        %v1821 = vsub.f32 %v1742, %v1789
        %v1822 = vsub.f32 %v1631, %v1790
        %v1823 = vsub.f32 %v1743, %v1791
        %v1824 = vpack.c.bf16 %v1794, %v1792
        %v1825 = vpack.c.bf16 %v1795, %v1793
        %v1826 = vpack.c.bf16 %v1798, %v1796
        %v1827 = vpack.c.bf16 %v1799, %v1797
        %v1828 = vpack.c.bf16 %v1802, %v1800
        %v1829 = vpack.c.bf16 %v1803, %v1801
        %v1830 = vpack.c.bf16 %v1806, %v1804
        %v1831 = vpack.c.bf16 %v1807, %v1805
        %v1832 = vpack.c.bf16 %v1810, %v1808
        %v1833 = vpack.c.bf16 %v1811, %v1809
        %v1834 = vpack.c.bf16 %v1814, %v1812
        %v1835 = vpack.c.bf16 %v1815, %v1813
        %v1836 = vpack.c.bf16 %v1818, %v1816
        %v1837 = vpack.c.bf16 %v1819, %v1817
        %v1838 = vpack.c.bf16 %v1822, %v1820
        %v1839 = vpack.c.bf16 %v1823, %v1821
        %v1840 = vld [vmem:[%s2] sm:$0xf]
        %v1841 = vld [vmem:[%s2 + $0x4] sm:$0xf]
        %v1842 = vld [vmem:[%s2 + $0x8] sm:$0xf]
        %v1843 = vld [vmem:[%s2 + $0xc] sm:$0xf]
        %v1844 = vld [vmem:[%s2 + $0x10] sm:$0xf]
        %v1845 = vld [vmem:[%s2 + $0x14] sm:$0xf]
        %v1846 = vld [vmem:[%s2 + $0x18] sm:$0xf]
        %v1847 = vld [vmem:[%s2 + $0x1c] sm:$0xf]
        %v1848 = vld [vmem:[%s2 + $0x20] sm:$0xf]
        %v1849 = vld [vmem:[%s2 + $0x24] sm:$0xf]
        %v1850 = vld [vmem:[%s2 + $0x28] sm:$0xf]
        %v1851 = vld [vmem:[%s2 + $0x2c] sm:$0xf]
        %v1852 = vld [vmem:[%s2 + $0x30] sm:$0xf]
        %v1853 = vld [vmem:[%s2 + $0x34] sm:$0xf]
        %v1854 = vld [vmem:[%s2 + $0x38] sm:$0xf]
        %v1855 = vld [vmem:[%s2 + $0x3c] sm:$0xf]
        %v1856 = vld [vmem:[%s2 + $0x40] sm:$0xf]
        %v1857 = vld [vmem:[%s2 + $0x44] sm:$0xf]
        %v1858 = vld [vmem:[%s2 + $0x48] sm:$0xf]
        %v1859 = vld [vmem:[%s2 + $0x4c] sm:$0xf]
        %v1860 = vld [vmem:[%s2 + $0x50] sm:$0xf]
        %v1861 = vld [vmem:[%s2 + $0x54] sm:$0xf]
        %v1862 = vld [vmem:[%s2 + $0x58] sm:$0xf]
        %v1863 = vld [vmem:[%s2 + $0x5c] sm:$0xf]
        %v1864 = vld [vmem:[%s2 + $0x60] sm:$0xf]
        %v1865 = vld [vmem:[%s2 + $0x64] sm:$0xf]
        %v1866 = vld [vmem:[%s2 + $0x68] sm:$0xf]
        %v1867 = vld [vmem:[%s2 + $0x6c] sm:$0xf]
        %v1868 = vld [vmem:[%s2 + $0x70] sm:$0xf]
        %v1869 = vld [vmem:[%s2 + $0x74] sm:$0xf]
        %v1870 = vld [vmem:[%s2 + $0x78] sm:$0xf]
        %v1871 = vld [vmem:[%s2 + $0x7c] sm:$0xf]
        %v1904 = vunpack.c.l.b16 %v1840
        %v1905 = vunpack.c.l.b16 %v1841
        %v1906 = vunpack.c.l.b16 %v1842
        %v1907 = vunpack.c.l.b16 %v1843
        %v1908 = vunpack.c.l.b16 %v1844
        %v1909 = vunpack.c.l.b16 %v1845
        %v1910 = vunpack.c.l.b16 %v1846
        %v1911 = vunpack.c.l.b16 %v1847
        %v1912 = vunpack.c.l.b16 %v1848
        %v1913 = vunpack.c.l.b16 %v1849
        %v1914 = vunpack.c.l.b16 %v1850
        %v1915 = vunpack.c.l.b16 %v1851
        %v1916 = vunpack.c.l.b16 %v1852
        %v1917 = vunpack.c.l.b16 %v1853
        %v1918 = vunpack.c.l.b16 %v1854
        %v1919 = vunpack.c.l.b16 %v1855
        %v1920 = vunpack.c.l.b16 %v1856
        %v1921 = vunpack.c.l.b16 %v1857
        %v1922 = vunpack.c.l.b16 %v1858
        %v1923 = vunpack.c.l.b16 %v1859
        %v1924 = vunpack.c.l.b16 %v1860
        %v1925 = vunpack.c.l.b16 %v1861
        %v1926 = vunpack.c.l.b16 %v1862
        %v1927 = vunpack.c.l.b16 %v1863
        %v1928 = vunpack.c.l.b16 %v1864
        %v1929 = vunpack.c.l.b16 %v1865
        %v1930 = vunpack.c.l.b16 %v1866
        %v1931 = vunpack.c.l.b16 %v1867
        %v1932 = vunpack.c.l.b16 %v1868
        %v1933 = vunpack.c.l.b16 %v1869
        %v1934 = vunpack.c.l.b16 %v1870
        %v1935 = vunpack.c.l.b16 %v1871
        %v1936 = vpack.c.b16 %v1905, %v1904
        %v1937 = vpack.c.b16 %v1907, %v1906
        %v1938 = vpack.c.b16 %v1909, %v1908
        %v1939 = vpack.c.b16 %v1911, %v1910
        %v1940 = vpack.c.b16 %v1913, %v1912
        %v1941 = vpack.c.b16 %v1915, %v1914
        %v1942 = vpack.c.b16 %v1917, %v1916
        %v1943 = vpack.c.b16 %v1919, %v1918
        %v1944 = vpack.c.b16 %v1921, %v1920
        %v1945 = vpack.c.b16 %v1923, %v1922
        %v1946 = vpack.c.b16 %v1925, %v1924
        %v1947 = vpack.c.b16 %v1927, %v1926
        %v1948 = vpack.c.b16 %v1929, %v1928
        %v1949 = vpack.c.b16 %v1931, %v1930
        %v1950 = vpack.c.b16 %v1933, %v1932
        %v1951 = vpack.c.b16 %v1935, %v1934
        %1968 = vmatprep.subr.bf16.mxu0 0
        %1969 = vmatpush1.bf16.msra.mxu0 %v1943
        %1970 = vmatprep.subr.bf16.mxu0 0
        %1971 = vmatpush1.bf16.msra.mxu0 %v1942
        %1972 = vmatprep.subr.bf16.mxu0 0
        %1973 = vmatpush1.bf16.msra.mxu0 %v1941
        %1974 = vmatprep.subr.bf16.mxu0 0
        %1975 = vmatpush1.bf16.msra.mxu0 %v1940
        %1976 = vmatprep.subr.bf16.mxu0 0
        %1977 = vmatpush1.bf16.msra.mxu0 %v1939
        %1978 = vmatprep.subr.bf16.mxu0 0
        %1979 = vmatpush1.bf16.msra.mxu0 %v1938
        %1980 = vmatprep.subr.bf16.mxu0 0
        %1981 = vmatpush1.bf16.msra.mxu0 %v1937
        %1982 = vmatprep.subr.bf16.mxu0 0
        %1983 = vmatpush1.bf16.msra.mxu0 %v1936
        %1984 = vmatprep.subr.bf16.mxu0 0
        %1985 = vmatpush2.bf16.msra.mxu0 %v1951
        %1986 = vmatprep.subr.bf16.mxu0 0
        %1987 = vmatpush2.bf16.msra.mxu0 %v1950
        %1988 = vmatprep.subr.bf16.mxu0 0
        %1989 = vmatpush2.bf16.msra.mxu0 %v1949
        %1990 = vmatprep.subr.bf16.mxu0 0
        %1991 = vmatpush2.bf16.msra.mxu0 %v1948
        %1992 = vmatprep.subr.bf16.mxu0 0
        %1993 = vmatpush2.bf16.msra.mxu0 %v1947
        %1994 = vmatprep.subr.bf16.mxu0 0
        %1995 = vmatpush2.bf16.msra.mxu0 %v1946
        %1996 = vmatprep.subr.bf16.mxu0 0
        %1997 = vmatpush2.bf16.msra.mxu0 %v1945
        %1998 = vmatprep.subr.bf16.mxu0 0
        %1999 = vmatpush2.bf16.msra.mxu0 %v1944
        %2000 = vmatprep.mubr.bf16.mxu0 %v1825
        %2001 = vmatmul.mubr.bf16.gmra.mxu0 %v1824
        %v2002 = vpop.f32.mrf.mxu0
        %v2003 = vadd.f32 0.0, %v2002
        %v2004 = vpop.f32.mrf.mxu0
        %v2005 = vpop.f32.mrf.mxu0
        %v2006 = vadd.f32 0.0, %v2005
        %v2007 = vpop.f32.mrf.mxu0
        %2008 = vmatprep.mubr.bf16.mxu0 %v1827
        %2009 = vmatmul.mubr.bf16.gmra.mxu0 %v1826
        %v2010 = vpop.f32.mrf.mxu0
        %v2011 = vadd.f32 0.0, %v2010
        %v2012 = vpop.f32.mrf.mxu0
        %v2013 = vpop.f32.mrf.mxu0
        %v2014 = vadd.f32 0.0, %v2013
        %v2015 = vpop.f32.mrf.mxu0
        %2016 = vmatprep.mubr.bf16.mxu0 %v1829
        %2017 = vmatmul.mubr.bf16.gmra.mxu0 %v1828
        %v2018 = vpop.f32.mrf.mxu0
        %v2019 = vadd.f32 0.0, %v2018
        %v2020 = vpop.f32.mrf.mxu0
        %v2021 = vpop.f32.mrf.mxu0
        %v2022 = vadd.f32 0.0, %v2021
        %v2023 = vpop.f32.mrf.mxu0
        %2024 = vmatprep.mubr.bf16.mxu0 %v1831
        %2025 = vmatmul.mubr.bf16.gmra.mxu0 %v1830
        %v2026 = vpop.f32.mrf.mxu0
        %v2027 = vadd.f32 0.0, %v2026
        %v2028 = vpop.f32.mrf.mxu0
        %v2029 = vpop.f32.mrf.mxu0
        %v2030 = vadd.f32 0.0, %v2029
        %v2031 = vpop.f32.mrf.mxu0
        %2032 = vmatprep.mubr.bf16.mxu0 %v1833
        %2033 = vmatmul.mubr.bf16.gmra.mxu0 %v1832
        %v2034 = vpop.f32.mrf.mxu0
        %v2035 = vadd.f32 0.0, %v2034
        %v2036 = vpop.f32.mrf.mxu0
        %v2037 = vpop.f32.mrf.mxu0
        %v2038 = vadd.f32 0.0, %v2037
        %v2039 = vpop.f32.mrf.mxu0
        %2040 = vmatprep.mubr.bf16.mxu0 %v1835
        %2041 = vmatmul.mubr.bf16.gmra.mxu0 %v1834
        %v2042 = vpop.f32.mrf.mxu0
        %v2043 = vadd.f32 0.0, %v2042
        %v2044 = vpop.f32.mrf.mxu0
        %v2045 = vpop.f32.mrf.mxu0
        %v2046 = vadd.f32 0.0, %v2045
        %v2047 = vpop.f32.mrf.mxu0
        %2048 = vmatprep.mubr.bf16.mxu0 %v1837
        %2049 = vmatmul.mubr.bf16.gmra.mxu0 %v1836
        %v2050 = vpop.f32.mrf.mxu0
        %v2051 = vadd.f32 0.0, %v2050
        %v2052 = vpop.f32.mrf.mxu0
        %v2053 = vpop.f32.mrf.mxu0
        %v2054 = vadd.f32 0.0, %v2053
        %v2055 = vpop.f32.mrf.mxu0
        %2056 = vmatprep.mubr.bf16.mxu0 %v1839
        %2057 = vmatmul.mubr.bf16.gmra.mxu0 %v1838
        %v2058 = vpop.f32.mrf.mxu0
        %v2059 = vadd.f32 0.0, %v2058
        %v2060 = vpop.f32.mrf.mxu0
        %v2061 = vpop.f32.mrf.mxu0
        %v2062 = vadd.f32 0.0, %v2061
        %v2063 = vpop.f32.mrf.mxu0
        %2064 = vdwg.mxu0
        %2065 = vmatprep.subr.bf16.mxu0 0
        %2066 = vmatpush1.bf16.msra.mxu0 %v1943
        %2067 = vmatprep.subr.bf16.mxu0 0
        %2068 = vmatpush1.bf16.msra.mxu0 %v1942
        %2069 = vmatprep.subr.bf16.mxu0 0
        %2070 = vmatpush1.bf16.msra.mxu0 %v1941
        %2071 = vmatprep.subr.bf16.mxu0 0
        %2072 = vmatpush1.bf16.msra.mxu0 %v1940
        %2073 = vmatprep.subr.bf16.mxu0 0
        %2074 = vmatpush1.bf16.msra.mxu0 %v1939
        %2075 = vmatprep.subr.bf16.mxu0 0
        %2076 = vmatpush1.bf16.msra.mxu0 %v1938
        %2077 = vmatprep.subr.bf16.mxu0 0
        %2078 = vmatpush1.bf16.msra.mxu0 %v1937
        %2079 = vmatprep.subr.bf16.mxu0 0
        %2080 = vmatpush1.bf16.msra.mxu0 %v1936
        %2081 = vmatprep.subr.bf16.mxu0 0
        %2082 = vmatpush2.bf16.msra.mxu0 %v1951
        %2083 = vmatprep.subr.bf16.mxu0 0
        %2084 = vmatpush2.bf16.msra.mxu0 %v1950
        %2085 = vmatprep.subr.bf16.mxu0 0
        %2086 = vmatpush2.bf16.msra.mxu0 %v1949
        %2087 = vmatprep.subr.bf16.mxu0 0
        %2088 = vmatpush2.bf16.msra.mxu0 %v1948
        %2089 = vmatprep.subr.bf16.mxu0 0
        %2090 = vmatpush2.bf16.msra.mxu0 %v1947
        %2091 = vmatprep.subr.bf16.mxu0 0
        %2092 = vmatpush2.bf16.msra.mxu0 %v1946
        %2093 = vmatprep.subr.bf16.mxu0 0
        %2094 = vmatpush2.bf16.msra.mxu0 %v1945
        %2095 = vmatprep.subr.bf16.mxu0 0
        %2096 = vmatpush2.bf16.msra.mxu0 %v1944
        %2097 = vmatprep.mubr.bf16.mxu0 %v1745
        %2098 = vmatmul.mubr.bf16.gmra.mxu0 %v1744
        %v2099 = vpop.f32.mrf.mxu0
        %v2100 = vadd.f32 %v2003, %v2099
        %v2101 = vpop.f32.mrf.mxu0
        %v2102 = vpop.f32.mrf.mxu0
        %v2103 = vadd.f32 %v2006, %v2102
        %v2104 = vpop.f32.mrf.mxu0
        %2105 = vmatprep.mubr.bf16.mxu0 %v1747
        %2106 = vmatmul.mubr.bf16.gmra.mxu0 %v1746
        %v2107 = vpop.f32.mrf.mxu0
        %v2108 = vadd.f32 %v2011, %v2107
        %v2109 = vpop.f32.mrf.mxu0
        %v2110 = vpop.f32.mrf.mxu0
        %v2111 = vadd.f32 %v2014, %v2110
        %v2112 = vpop.f32.mrf.mxu0
        %2113 = vmatprep.mubr.bf16.mxu0 %v1749
        %2114 = vmatmul.mubr.bf16.gmra.mxu0 %v1748
        %v2115 = vpop.f32.mrf.mxu0
        %v2116 = vadd.f32 %v2019, %v2115
        %v2117 = vpop.f32.mrf.mxu0
        %v2118 = vpop.f32.mrf.mxu0
        %v2119 = vadd.f32 %v2022, %v2118
        %v2120 = vpop.f32.mrf.mxu0
        %2121 = vmatprep.mubr.bf16.mxu0 %v1751
        %2122 = vmatmul.mubr.bf16.gmra.mxu0 %v1750
        %v2123 = vpop.f32.mrf.mxu0
        %v2124 = vadd.f32 %v2027, %v2123
        %v2125 = vpop.f32.mrf.mxu0
        %v2126 = vpop.f32.mrf.mxu0
        %v2127 = vadd.f32 %v2030, %v2126
        %v2128 = vpop.f32.mrf.mxu0
        %2129 = vmatprep.mubr.bf16.mxu0 %v1753
        %2130 = vmatmul.mubr.bf16.gmra.mxu0 %v1752
        %v2131 = vpop.f32.mrf.mxu0
        %v2132 = vadd.f32 %v2035, %v2131
        %v2133 = vpop.f32.mrf.mxu0
        %v2134 = vpop.f32.mrf.mxu0
        %v2135 = vadd.f32 %v2038, %v2134
        %v2136 = vpop.f32.mrf.mxu0
        %2137 = vmatprep.mubr.bf16.mxu0 %v1755
        %2138 = vmatmul.mubr.bf16.gmra.mxu0 %v1754
        %v2139 = vpop.f32.mrf.mxu0
        %v2140 = vadd.f32 %v2043, %v2139
        %v2141 = vpop.f32.mrf.mxu0
        %v2142 = vpop.f32.mrf.mxu0
        %v2143 = vadd.f32 %v2046, %v2142
        %v2144 = vpop.f32.mrf.mxu0
        %2145 = vmatprep.mubr.bf16.mxu0 %v1757
        %2146 = vmatmul.mubr.bf16.gmra.mxu0 %v1756
        %v2147 = vpop.f32.mrf.mxu0
        %v2148 = vadd.f32 %v2051, %v2147
        %v2149 = vpop.f32.mrf.mxu0
        %v2150 = vpop.f32.mrf.mxu0
        %v2151 = vadd.f32 %v2054, %v2150
        %v2152 = vpop.f32.mrf.mxu0
        %2153 = vmatprep.mubr.bf16.mxu0 %v1759
        %2154 = vmatmul.mubr.bf16.gmra.mxu0 %v1758
        %v2155 = vpop.f32.mrf.mxu0
        %v2156 = vadd.f32 %v2059, %v2155
        %v2157 = vpop.f32.mrf.mxu0
        %v2158 = vpop.f32.mrf.mxu0
        %v2159 = vadd.f32 %v2062, %v2158
        %v2160 = vpop.f32.mrf.mxu0
        %2161 = vdwg.mxu0
        %v2162 = vstv %s262
        %v2163 = vadd.f32 %v2100, %v2162
        %v2164 = vadd.f32 %v2103, %v2162
        %v2165 = vadd.f32 %v2108, %v2162
        %v2166 = vadd.f32 %v2111, %v2162
        %v2167 = vadd.f32 %v2116, %v2162
        %v2168 = vadd.f32 %v2119, %v2162
        %v2169 = vadd.f32 %v2124, %v2162
        %v2170 = vadd.f32 %v2127, %v2162
        %v2171 = vadd.f32 %v2132, %v2162
        %v2172 = vadd.f32 %v2135, %v2162
        %v2173 = vadd.f32 %v2140, %v2162
        %v2174 = vadd.f32 %v2143, %v2162
        %v2175 = vadd.f32 %v2148, %v2162
        %v2176 = vadd.f32 %v2151, %v2162
        %v2177 = vadd.f32 %v2156, %v2162
        %v2178 = vadd.f32 %v2159, %v2162
        %2187 = vrot.lane.b32.xlu0 %v2167, 64
        %v2188 = vpop.permute.xlu0 %2187
        %2189 = vrot.lane.b32.xlu0 %v2168, 64
        %v2190 = vpop.permute.xlu0 %2189
        %2191 = vrot.lane.b32.xlu0 %v2169, 64
        %v2192 = vpop.permute.xlu0 %2191
        %2193 = vrot.lane.b32.xlu0 %v2170, 64
        %v2194 = vpop.permute.xlu0 %2193
        %2195 = vrot.lane.b32.xlu0 %v2175, 64
        %v2196 = vpop.permute.xlu0 %2195
        %2197 = vrot.lane.b32.xlu0 %v2176, 64
        %v2198 = vpop.permute.xlu0 %2197
        %2199 = vrot.lane.b32.xlu0 %v2177, 64
        %v2200 = vpop.permute.xlu0 %2199
        %2201 = vrot.lane.b32.xlu0 %v2178, 64
        %v2202 = vpop.permute.xlu0 %2201
        %v2211 = vsel %vm430, %v2163, %v2188
        %v2212 = vsel %vm430, %v2164, %v2190
        %v2213 = vsel %vm430, %v2165, %v2192
        %v2214 = vsel %vm430, %v2166, %v2194
        %v2215 = vsel %vm430, %v2171, %v2196
        %v2216 = vsel %vm430, %v2172, %v2198
        %v2217 = vsel %vm430, %v2173, %v2200
        %v2218 = vsel %vm430, %v2174, %v2202
        %2219 = vst [vmem:[%s241] sm:$0xff] %v2211
        %2220 = vst [vmem:[%s241 + $0x8] sm:$0xff] %v2212
        %2221 = vst [vmem:[%s241 + $0x10] sm:$0xff] %v2213
        %2222 = vst [vmem:[%s241 + $0x18] sm:$0xff] %v2214
        %2223 = vst [vmem:[%s241 + $0x20] sm:$0xff] %v2215
        %2224 = vst [vmem:[%s241 + $0x28] sm:$0xff] %v2216
        %2225 = vst [vmem:[%s241 + $0x30] sm:$0xff] %v2217
        %2226 = vst [vmem:[%s241 + $0x38] sm:$0xff] %v2218
        %s2227 = sand.u32 %s102, 1
        %s2228 = scalar_lea.sflag [#allocation4], %s2227
        %s2229 = sand.u32 %s102, 1
        %s2230 = smul.addr %s2229, 64
        %s2231 = scalar_lea.vmem [#allocation7], %s2230
        %s2232 = sand.u32 %s128, 1
        %s2233 = scalar_lea.sflag [#allocation9], %s2232
        %s2234 = sand.u32 %s128, 1
        %s2235 = smul.addr %s2234, 64
        %s2236 = scalar_lea.vmem [#allocation8], %s2235
        // Predicated region
        $region41: #{tpu_custom_call.1} parent=31 // pred_check
          %p2237 = pneg %p112
        $region42: #{tpu_custom_call.1} parent=31 // pred_check_branch
          %2239 = sbr.rel (%p2237) target = $region44
        $region43: #{tpu_custom_call.1} parent=31 // pred_region
          %s2240 = smul.u32 2, %s26
          %s2242 = ssub.s32 1024, 1024
          %2243 = vsyncadd %s2228, %s2242
          %s2244 = smul.addr %s2240, 4
          %s2245 = smul.addr %s2244, 128
          %s2246 = scalar_lea.hbm %s3, %s2245
          %s2247 = sshll.u32 %s2231, 4
          %s2248 = int_to_ptr.vmem [resolvable:$true] %s2247
          %2253 = dma.vmem_to_hbm [thread:$0]  %s2248, 1024, %s2246, %s2228, 256, 256, 16
        $region44: #{tpu_custom_call.1} parent=31 // pred_fallthru
          _
        // Predicated region
        $region45: #{tpu_custom_call.1} parent=31 // pred_check
          %p2254 = pneg %p138
        $region46: #{tpu_custom_call.1} parent=31 // pred_check_branch
          %2256 = sbr.rel (%p2254) target = $region48
        $region47: #{tpu_custom_call.1} parent=31 // pred_region
          %s2257 = smul.u32 2, %s26
          %s2259 = ssub.s32 1024, 1024
          %2260 = vsyncadd %s2233, %s2259
          %s2261 = smul.addr %s2257, 4
          %s2262 = smul.addr %s2261, 128
          %s2263 = scalar_lea.hbm %s4, %s2262
          %s2264 = sshll.u32 %s2236, 4
          %s2265 = int_to_ptr.vmem [resolvable:$true] %s2264
          %2270 = dma.vmem_to_hbm [thread:$0]  %s2265, 1024, %s2263, %s2233, 128, 128, 8
        $region48: #{tpu_custom_call.1} parent=31 // pred_fallthru
          _
      $region32: #{tpu_custom_call.1} parent=5 // pred_fallthru
        _
      %p2271 = scmp.le.s32.totalorder 2, %s21
      // Predicated region
      $region49: #{tpu_custom_call.1} parent=5 // pred_check
        %p2272 = pneg %p2271
      $region50: #{tpu_custom_call.1} parent=5 // pred_check_branch
        %2274 = sbr.rel (%p2272) target = $region52
      $region51: #{tpu_custom_call.1} parent=5 // pred_region
        %s2275 = ssub.s32 %s21, 2
        // Predicated region
        $region53: #{tpu_custom_call.1} parent=51 // pred_check
          %p2276 = pneg %p118
        $region54: #{tpu_custom_call.1} parent=51 // pred_check_branch
          %2278 = sbr.rel (%p2276) target = $region56
        $region55: #{tpu_custom_call.1} parent=51 // pred_region
          %s2279 = sand.u32 %s103, 1
          %s2280 = scalar_lea.sflag [#allocation4], %s2279
          %s2281 = sand.u32 %s103, 1
          %s2282 = smul.addr %s2281, 64
          %s2283 = scalar_lea.vmem [#allocation7], %s2282
          %2284 = dma.done %s2280, 1024
        $region56: #{tpu_custom_call.1} parent=51 // pred_fallthru
          _
        // Predicated region
        $region57: #{tpu_custom_call.1} parent=51 // pred_check
          %p2285 = pneg %p144
        $region58: #{tpu_custom_call.1} parent=51 // pred_check_branch
          %2287 = sbr.rel (%p2285) target = $region60
        $region59: #{tpu_custom_call.1} parent=51 // pred_region
          %s2288 = sand.u32 %s129, 1
          %s2289 = scalar_lea.sflag [#allocation9], %s2288
          %s2290 = sand.u32 %s129, 1
          %s2291 = smul.addr %s2290, 64
          %s2292 = scalar_lea.vmem [#allocation8], %s2291
          %2293 = dma.done %s2289, 1024
        $region60: #{tpu_custom_call.1} parent=51 // pred_fallthru
          _
      $region52: #{tpu_custom_call.1} parent=5 // pred_fallthru
        _
    $region6: #{tpu_custom_call.1} parent=1 // loop_footer
      %s25 = sadd.s32 1, %s21
    $region7: #{tpu_custom_call.1} parent=1 // loop_footer_branch
      %20 = sbr.rel target = $region3
    $region8: #{tpu_custom_call.1} parent=1 // loop_exit
      _
    %2294 = vsyncpa [#allocation3], 1
    %s2295 = scalar_lea.sflag [#allocation3], 1
    %2296 = vsyncpa %s2295, 1
    %2297 = vsyncpa [#allocation4], 1
    %s2298 = scalar_lea.sflag [#allocation4], 1
    %2299 = vsyncpa %s2298, 1
    %2300 = vsyncpa [#allocation9], 1
    %s2301 = scalar_lea.sflag [#allocation9], 1
    %2302 = vsyncpa %s2301, 1
    %2303 = vsyncpa [#allocation5], 1
    %s2304 = scalar_lea.sflag [#allocation5], 1
    %2305 = vsyncpa %s2304, 1

</llo_original>
